<compile_context>
chip_gen: v5e
topology: v5e:2x2
jax: 0.10.0
libtpu: 0.0.40
codegen_flags: <defaults>
</compile_context>

<pallas_src>
import functools
import math

import jax
import jax.numpy as jnp
from jax.experimental import pallas as pl
from jax.experimental.pallas import tpu as pltpu

C_IN, C_MID = 128, 32
C1, C2, C3 = 96, 96, 64          # conv1 / conv2 / conv3 output channels
C_BR = C1 + C2 + C3              # 256 branch channels
C_OUT = C_IN + C_BR              # 384 = 3 * 128
K_BIG = 5 * C_MID                # 160: [y, y(h-1), y(h+1), y(w-1), y(w+1)]


def _block_c_kernel(x_ref, xup_ref, xdn_ref, mask_ref,
                    wct_ref, bc_ref, wbigt_ref, bbig_ref, o_ref,
                    *, W, TH, KH):
    """One (image, row-tile) grid step.  Layout: channels on sublanes,
    flattened pixels on the lane axis (NCHW consumed directly)."""
    t = pl.program_id(1)
    n_tiles = pl.num_programs(1)
    THW = TH * W
    mm_dtype = wct_ref.dtype

    wct = wct_ref[...]                       # (32, 128)  MXU operand dtype
    bc = bc_ref[...]                         # (32, 1)    f32

    x = x_ref[0]                             # (128, THW) I/O dtype
    x_mm = x if x.dtype == mm_dtype else x.astype(mm_dtype)

    def conv1x1(inp):                        # 128 -> 32 channels + ReLU (MXU)
        z = jnp.dot(wct, inp, preferred_element_type=jnp.float32) + bc
        return jnp.maximum(z, 0.0)

    y_c = conv1x1(x_mm).astype(mm_dtype)     # (32, THW)

    # Halo rows (row above / below this tile), recomputed through the 1x1
    # conv + ReLU and zeroed at image edges ('same' zero padding acts on y).
    xu = xup_ref[0, :, (KH - 1) * W:]        # (128, W) == global row t*TH - 1
    xd = xdn_ref[0, :, :W]                   # (128, W) == global row (t+1)*TH
    xu = xu if xu.dtype == mm_dtype else xu.astype(mm_dtype)
    xd = xd if xd.dtype == mm_dtype else xd.astype(mm_dtype)
    y_u = (conv1x1(xu) * (t > 0).astype(jnp.float32)).astype(mm_dtype)
    y_d = (conv1x1(xd) * (t < n_tiles - 1).astype(jnp.float32)).astype(mm_dtype)

    # Spatial taps of y in the flat (32, px) layout.  Vertical taps splice in
    # the halo rows; horizontal taps shift by one pixel and are masked so they
    # never wrap across row (image) boundaries.
    y_up = jnp.concatenate([y_u, y_c[:, :THW - W]], axis=1)          # y[h-1,w]
    y_dn = jnp.concatenate([y_c[:, W:], y_d], axis=1)                # y[h+1,w]
    zero1 = jnp.zeros((C_MID, 1), mm_dtype)
    m_l = mask_ref[0:1, :]                                           # (1, THW)
    m_r = mask_ref[1:2, :]
    y_l = jnp.concatenate([zero1, y_c[:, :THW - 1]], axis=1) * m_l   # y[h,w-1]
    y_r = jnp.concatenate([y_c[:, 1:], zero1], axis=1) * m_r         # y[h,w+1]

    # Fused operand (160, px) via SUBLANE stacking, one K=160 x M=256 matmul.
    a = jnp.concatenate([y_c, y_up, y_dn, y_l, y_r], axis=0)
    z = jnp.dot(wbigt_ref[...], a, preferred_element_type=jnp.float32)
    z = jnp.maximum(z + bbig_ref[...], 0.0)                          # (256, THW)

    # Output slab [x | conv1 | conv2 | conv3]: sublane offsets 0 / 128,
    # lane-dense (THW is a multiple of 128 when tiled).
    # TODO(synk): if the consumer can take two tensors, drop the identity copy
    # (channels [0,128)) and save ~25% of the HBM write traffic.
    o_ref[0, :C_IN, :] = x.astype(o_ref.dtype)
    o_ref[0, C_IN:, :] = z.astype(o_ref.dtype)


def pack_params(params, matmul_dtype=jnp.bfloat16):
    """Pack branch weights once into transposed MXU operands.

    Wbig row blocks (32 rows each): [y, y(h-1), y(h+1), y(w-1), y(w+1)]
    Wbig column blocks:             [conv1 (96) | conv2 (96) | conv3 (64)]
    Returned transposed: wct (32,128), wbigt (256,160); biases stay f32.
    """
    wc, bc, w1, b1, w2, b2, w3, b3 = params
    wbig = jnp.zeros((K_BIG, C_BR), jnp.float32)
    wbig = wbig.at[0:32, 0:96].set(w1[1])        # center tap -> conv1
    wbig = wbig.at[0:32, 96:192].set(w2[1])      # center tap -> conv2
    wbig = wbig.at[0:32, 192:256].set(w3)        # center tap -> conv3
    wbig = wbig.at[32:64, 0:96].set(w1[0])       # y[h-1] * w1[kh=0]
    wbig = wbig.at[64:96, 0:96].set(w1[2])       # y[h+1] * w1[kh=2]
    wbig = wbig.at[96:128, 96:192].set(w2[0])    # y[w-1] * w2[kw=0]
    wbig = wbig.at[128:160, 96:192].set(w2[2])   # y[w+1] * w2[kw=2]
    wct = wc.T                                                   # (32, 128)
    wbigt = wbig.T                                               # (256, 160)
    bct = bc.reshape(C_MID, 1)
    bbigt = jnp.concatenate([b1, b2, b3], axis=1).reshape(C_BR, 1)
    return (wct.astype(matmul_dtype), bct.astype(jnp.float32),
            wbigt.astype(matmul_dtype), bbigt.astype(jnp.float32))


def _choose_tiling(H, W, max_tile_px):
    """Pick (tile rows TH, halo-block rows KH): TH divides H, TH is a multiple
    of KH, and KH*W (hence TH*W) is a multiple of 128 lanes.  Falls back to a
    single whole-image tile if no such split exists."""
    K = 128 // math.gcd(W, 128)              # K*W % 128 == 0
    best = None
    th = K
    while th <= H:
        if H % th == 0 and th * W <= max_tile_px:
            best = th
        th += K
    if best is None:
        return H, H                          # one tile per image, no halos
    return best, K


def _pick_vmem_limit():
    """Generation-aware scoped-VMEM ceiling; safe conservative default."""
    default = 48 * 1024 * 1024
    try:
        info = pltpu.get_tpu_info()
        cap = None
        for name in ("vmem_capacity_bytes", "vmem_size_bytes", "vmem_bytes"):
            val = getattr(info, name, None)
            if isinstance(val, int) and val > 0:
                cap = val
                break
        if cap is None:
            return default
        return int(max(32 * 1024 * 1024,
                       min(cap - 16 * 1024 * 1024, 100 * 1024 * 1024)))
    except Exception:
        return default


def block_c_forward(x_nchw, packed_params, *, max_tile_px=4096):
    """NCHW (N,128,H,W) -> NCHW (N,384,H,W) == cat([x, conv1, conv2, conv3]).
    Output dtype follows the input dtype (pass bf16 x for bf16 HBM I/O)."""
    wct, bct, wbigt, bbigt = packed_params
    N, C, H, W = x_nchw.shape
    assert C == C_IN
    HW = H * W
    TH, KH = _choose_tiling(H, W, max_tile_px)
    T = H // TH
    THW = TH * W
    r = TH // KH
    hb = H // KH
    mm_dtype = wct.dtype
    out_dtype = x_nchw.dtype

    # Free reshape (contiguous NCHW): pixels flattened onto the lane axis.
    x_flat = x_nchw.reshape(N, C_IN, HW)

    # Per-column 0/1 masks killing the horizontal taps at w==0 / w==W-1.
    w_idx = jnp.arange(THW, dtype=jnp.int32) % W
    edge_mask = jnp.stack([w_idx != 0, w_idx != W - 1]).astype(mm_dtype)

    kernel = functools.partial(_block_c_kernel, W=W, TH=TH, KH=KH)

    def _resident(arr):
        nd = arr.ndim
        return pl.BlockSpec(arr.shape, lambda n, t, _nd=nd: (0,) * _nd)

    out = pl.pallas_call(
        kernel,
        out_shape=jax.ShapeDtypeStruct((N, C_OUT, HW), out_dtype),
        grid_spec=pltpu.PrefetchScalarGridSpec(
            num_scalar_prefetch=0,
            grid=(N, T),
            in_specs=[
                # Center tile.
                pl.BlockSpec((1, C_IN, THW), lambda n, t: (n, 0, t)),
                # Halo row-block above (clamped at the top image edge).
                pl.BlockSpec((1, C_IN, KH * W),
                             lambda n, t: (n, 0, jnp.maximum(t * r - 1, 0))),
                # Halo row-block below (clamped at the bottom image edge).
                pl.BlockSpec((1, C_IN, KH * W),
                             lambda n, t: (n, 0, jnp.minimum((t + 1) * r, hb - 1))),
                # Edge masks + packed weights: resident (same block every step).
                pl.BlockSpec((2, THW), lambda n, t: (0, 0)),
                _resident(wct), _resident(bct), _resident(wbigt), _resident(bbigt),
            ],
            out_specs=pl.BlockSpec((1, C_OUT, THW), lambda n, t: (n, 0, t)),
        ),
        compiler_params=pltpu.CompilerParams(
            dimension_semantics=("parallel", "parallel"),
            vmem_limit_bytes=_pick_vmem_limit(),
        ),
    )(x_flat, x_flat, x_flat, edge_mask, wct, bct, wbigt, bbigt)

    return out.reshape(N, C_OUT, H, W)       # free reshape back to NCHW


def _ref_forward(x, params):
    """Pure-JAX reference (lax.conv), NCHW, to validate the kernel."""
    wc, bc, w1, b1, w2, b2, w3, b3 = params
    dn = ('NCHW', 'OIHW', 'NCHW')

    def conv(inp, w, pad):
        return jax.lax.conv_general_dilated(inp, w, (1, 1), pad,
                                            dimension_numbers=dn)

    y = jax.nn.relu(conv(x, wc.T.reshape(C_MID, C_IN, 1, 1),
                         [(0, 0), (0, 0)]) + bc.reshape(1, C_MID, 1, 1))
    x1 = jax.nn.relu(conv(y, jnp.transpose(w1, (2, 1, 0)).reshape(C1, C_MID, 3, 1),
                          [(1, 1), (0, 0)]) + b1.reshape(1, C1, 1, 1))
    x2 = jax.nn.relu(conv(y, jnp.transpose(w2, (2, 1, 0)).reshape(C2, C_MID, 1, 3),
                          [(0, 0), (1, 1)]) + b2.reshape(1, C2, 1, 1))
    x3 = jax.nn.relu(conv(y, w3.T.reshape(C3, C_MID, 1, 1),
                          [(0, 0), (0, 0)]) + b3.reshape(1, C3, 1, 1))
    return jnp.concatenate([x, x1, x2, x3], axis=1)


def init_params(key):
    ks = jax.random.split(key, 8)
    s = 0.05
    wc = jax.random.normal(ks[0], (C_IN, C_MID), jnp.float32) * s
    bc = jax.random.normal(ks[1], (1, C_MID), jnp.float32) * s
    w1 = jax.random.normal(ks[2], (3, C_MID, C1), jnp.float32) * s  # (kH, in, out)
    b1 = jax.random.normal(ks[3], (1, C1), jnp.float32) * s
    w2 = jax.random.normal(ks[4], (3, C_MID, C2), jnp.float32) * s  # (kW, in, out)
    b2 = jax.random.normal(ks[5], (1, C2), jnp.float32) * s
    w3 = jax.random.normal(ks[6], (C_MID, C3), jnp.float32) * s
    b3 = jax.random.normal(ks[7], (1, C3), jnp.float32) * s
    return (wc, bc, w1, b1, w2, b2, w3, b3)


if __name__ == "__main__":
    key = jax.random.PRNGKey(0)
    kx, kp = jax.random.split(key)
    N, H, W = 2, 16, 16
    x = jax.random.normal(kx, (N, C_IN, H, W), jnp.float32)
    params = init_params(kp)

    ref = jax.block_until_ready(_ref_forward(x, params))

    # f32 operands + f32 I/O, halo-tiled grid (2 row-tiles): tight check.
    out = jax.block_until_ready(
        block_c_forward(x, pack_params(params, jnp.float32), max_tile_px=128))
    assert out.shape == (N, C_OUT, H, W), out.shape
    assert jnp.allclose(out, ref, rtol=1e-4, atol=1e-4), float(
        jnp.max(jnp.abs(out - ref)))

    # f32, single whole-image tile (no halos on this path): same result.
    out1 = jax.block_until_ready(
        block_c_forward(x, pack_params(params, jnp.float32)))
    assert jnp.allclose(out1, ref, rtol=1e-4, atol=1e-4), float(
        jnp.max(jnp.abs(out1 - ref)))

    # bf16 activations on the HBM boundary + bf16 MXU operands (all gens),
    # f32 accumulation: loose check.
    out_bf16 = jax.block_until_ready(
        block_c_forward(x.astype(jnp.bfloat16),
                        pack_params(params, jnp.bfloat16), max_tile_px=128))
    assert out_bf16.dtype == jnp.bfloat16
    err = float(jnp.max(jnp.abs(out_bf16.astype(jnp.float32) - ref)))
    assert jnp.allclose(out_bf16.astype(jnp.float32), ref,
                        rtol=1e-1, atol=1e-1), err

    print("KERNEL_OK")
</pallas_src>

<mosaic_0001>
module attributes {stable_mosaic.version = 11 : i64} {
  func.func @_block_c_kernel(%arg0: i32, %arg1: i32, %arg2: memref<1x128x128xf32, #tpu.memory_space<vmem>>, %arg3: memref<1x128x128xf32, #tpu.memory_space<vmem>>, %arg4: memref<1x128x128xf32, #tpu.memory_space<vmem>>, %arg5: memref<2x128xf32, #tpu.memory_space<vmem>>, %arg6: memref<32x128xf32, #tpu.memory_space<vmem>>, %arg7: memref<32x1xf32, #tpu.memory_space<vmem>>, %arg8: memref<256x160xf32, #tpu.memory_space<vmem>>, %arg9: memref<256x1xf32, #tpu.memory_space<vmem>>, %arg10: memref<1x384x128xf32, #tpu.memory_space<vmem>>) attributes {dimension_semantics = [#tpu.dimension_semantics<parallel>, #tpu.dimension_semantics<parallel>], iteration_bounds = array<i64: 2, 2>, scalar_prefetch = 0 : i64, scratch_operands = 0 : i64, tpu.core_type = #tpu.core_type<tc>, window_params = [{transform_indices = @transform_0, window_bounds = array<i64: 1, 128, 128>}, {transform_indices = @transform_1, window_bounds = array<i64: 1, 128, 128>}, {transform_indices = @transform_2, window_bounds = array<i64: 1, 128, 128>}, {pipeline_mode = #tpu.pipeline_mode<synchronous>, transform_indices = @transform_3, window_bounds = array<i64: 2, 128>}, {pipeline_mode = #tpu.pipeline_mode<synchronous>, transform_indices = @transform_4, window_bounds = array<i64: 32, 128>}, {pipeline_mode = #tpu.pipeline_mode<synchronous>, transform_indices = @transform_5, window_bounds = array<i64: 32, 1>}, {pipeline_mode = #tpu.pipeline_mode<synchronous>, transform_indices = @transform_6, window_bounds = array<i64: 256, 160>}, {pipeline_mode = #tpu.pipeline_mode<synchronous>, transform_indices = @transform_7, window_bounds = array<i64: 256, 1>}, {transform_indices = @transform_8, window_bounds = array<i64: 1, 384, 128>}]} {
    %c0 = arith.constant 0 : index
    %c0_0 = arith.constant 0 : index
    %0 = vector.load %arg6[%c0, %c0_0] : memref<32x128xf32, #tpu.memory_space<vmem>>, vector<32x128xf32>
    %c0_1 = arith.constant 0 : index
    %c0_2 = arith.constant 0 : index
    %1 = vector.load %arg7[%c0_1, %c0_2] : memref<32x1xf32, #tpu.memory_space<vmem>>, vector<32x1xf32>
    %c0_3 = arith.constant 0 : index
    %c0_4 = arith.constant 0 : index
    %c0_5 = arith.constant 0 : index
    %2 = vector.load %arg2[%c0_3, %c0_4, %c0_5] : memref<1x128x128xf32, #tpu.memory_space<vmem>>, vector<1x128x128xf32>
    %3 = vector.shape_cast %2 : vector<1x128x128xf32> to vector<128x128xf32>
    %cst = arith.constant dense<0.000000e+00> : vector<32x128xf32>
    %4 = tpu.matmul %0, %3, %cst {dimension_numbers = #tpu.dot_dimension_numbers<[1], [0], [0], [1], [0, 0, 1, 1], [], []>} : vector<32x128xf32>, vector<128x128xf32>, vector<32x128xf32> -> vector<32x128xf32>
    %5 = vector.broadcast %1 : vector<32x1xf32> to vector<32x128xf32>
    %6 = arith.addf %4, %5 : vector<32x128xf32>
    %cst_6 = arith.constant 0.000000e+00 : f32
    %7 = vector.broadcast %cst_6 : f32 to vector<32x128xf32>
    %8 = arith.maximumf %6, %7 : vector<32x128xf32>
    %c0_7 = arith.constant 0 : index
    %c0_8 = arith.constant 0 : index
    %c112 = arith.constant 112 : index
    %9 = vector.load %arg3[%c0_7, %c0_8, %c112] : memref<1x128x128xf32, #tpu.memory_space<vmem>>, vector<1x128x16xf32>
    %10 = vector.shape_cast %9 : vector<1x128x16xf32> to vector<128x16xf32>
    %c0_9 = arith.constant 0 : index
    %c0_10 = arith.constant 0 : index
    %c0_11 = arith.constant 0 : index
    %11 = vector.load %arg4[%c0_9, %c0_10, %c0_11] : memref<1x128x128xf32, #tpu.memory_space<vmem>>, vector<1x128x16xf32>
    %12 = vector.shape_cast %11 : vector<1x128x16xf32> to vector<128x16xf32>
    %cst_12 = arith.constant dense<0.000000e+00> : vector<32x16xf32>
    %13 = tpu.matmul %0, %10, %cst_12 {dimension_numbers = #tpu.dot_dimension_numbers<[1], [0], [0], [1], [0, 0, 1, 1], [], []>} : vector<32x128xf32>, vector<128x16xf32>, vector<32x16xf32> -> vector<32x16xf32>
    %14 = vector.broadcast %1 : vector<32x1xf32> to vector<32x16xf32>
    %15 = arith.addf %13, %14 : vector<32x16xf32>
    %cst_13 = arith.constant 0.000000e+00 : f32
    %16 = vector.broadcast %cst_13 : f32 to vector<32x16xf32>
    %17 = arith.maximumf %15, %16 : vector<32x16xf32>
    %c0_i32 = arith.constant 0 : i32
    %18 = arith.cmpi sgt, %arg1, %c0_i32 : i32
    %19 = arith.extui %18 : i1 to i32
    %20 = arith.sitofp %19 : i32 to f32
    %21 = vector.broadcast %20 : f32 to vector<32x16xf32>
    %22 = arith.mulf %17, %21 : vector<32x16xf32>
    %cst_14 = arith.constant dense<0.000000e+00> : vector<32x16xf32>
    %23 = tpu.matmul %0, %12, %cst_14 {dimension_numbers = #tpu.dot_dimension_numbers<[1], [0], [0], [1], [0, 0, 1, 1], [], []>} : vector<32x128xf32>, vector<128x16xf32>, vector<32x16xf32> -> vector<32x16xf32>
    %24 = vector.broadcast %1 : vector<32x1xf32> to vector<32x16xf32>
    %25 = arith.addf %23, %24 : vector<32x16xf32>
    %cst_15 = arith.constant 0.000000e+00 : f32
    %26 = vector.broadcast %cst_15 : f32 to vector<32x16xf32>
    %27 = arith.maximumf %25, %26 : vector<32x16xf32>
    %c1_i32 = arith.constant 1 : i32
    %28 = arith.cmpi slt, %arg1, %c1_i32 : i32
    %29 = arith.extui %28 : i1 to i32
    %30 = arith.sitofp %29 : i32 to f32
    %31 = vector.broadcast %30 : f32 to vector<32x16xf32>
    %32 = arith.mulf %27, %31 : vector<32x16xf32>
    %33 = vector.extract_strided_slice %8 {offsets = [0, 0], sizes = [32, 112], strides = [1, 1]} : vector<32x128xf32> to vector<32x112xf32>
    %34 = tpu.concatenate %22, %33 in 1 : vector<32x16xf32>, vector<32x112xf32> -> vector<32x128xf32>
    %35 = vector.extract_strided_slice %8 {offsets = [0, 16], sizes = [32, 112], strides = [1, 1]} : vector<32x128xf32> to vector<32x112xf32>
    %36 = tpu.concatenate %35, %32 in 1 : vector<32x112xf32>, vector<32x16xf32> -> vector<32x128xf32>
    %cst_16 = arith.constant 0.000000e+00 : f32
    %37 = vector.broadcast %cst_16 : f32 to vector<32x1xf32>
    %c0_17 = arith.constant 0 : index
    %c0_18 = arith.constant 0 : index
    %38 = vector.load %arg5[%c0_17, %c0_18] : memref<2x128xf32, #tpu.memory_space<vmem>>, vector<1x128xf32>
    %c1 = arith.constant 1 : index
    %c0_19 = arith.constant 0 : index
    %39 = vector.load %arg5[%c1, %c0_19] : memref<2x128xf32, #tpu.memory_space<vmem>>, vector<1x128xf32>
    %40 = vector.extract_strided_slice %8 {offsets = [0, 0], sizes = [32, 127], strides = [1, 1]} : vector<32x128xf32> to vector<32x127xf32>
    %41 = tpu.concatenate %37, %40 in 1 : vector<32x1xf32>, vector<32x127xf32> -> vector<32x128xf32>
    %42 = vector.broadcast %38 : vector<1x128xf32> to vector<32x128xf32>
    %43 = arith.mulf %41, %42 : vector<32x128xf32>
    %44 = vector.extract_strided_slice %8 {offsets = [0, 1], sizes = [32, 127], strides = [1, 1]} : vector<32x128xf32> to vector<32x127xf32>
    %45 = tpu.concatenate %44, %37 in 1 : vector<32x127xf32>, vector<32x1xf32> -> vector<32x128xf32>
    %46 = vector.broadcast %39 : vector<1x128xf32> to vector<32x128xf32>
    %47 = arith.mulf %45, %46 : vector<32x128xf32>
    %48 = tpu.concatenate %8, %34, %36, %43, %47 in 0 : vector<32x128xf32>, vector<32x128xf32>, vector<32x128xf32>, vector<32x128xf32>, vector<32x128xf32> -> vector<160x128xf32>
    %c0_20 = arith.constant 0 : index
    %c0_21 = arith.constant 0 : index
    %49 = vector.load %arg8[%c0_20, %c0_21] : memref<256x160xf32, #tpu.memory_space<vmem>>, vector<256x160xf32>
    %cst_22 = arith.constant dense<0.000000e+00> : vector<256x128xf32>
    %50 = tpu.matmul %49, %48, %cst_22 {dimension_numbers = #tpu.dot_dimension_numbers<[1], [0], [0], [1], [0, 0, 1, 1], [], []>} : vector<256x160xf32>, vector<160x128xf32>, vector<256x128xf32> -> vector<256x128xf32>
    %c0_23 = arith.constant 0 : index
    %c0_24 = arith.constant 0 : index
    %51 = vector.load %arg9[%c0_23, %c0_24] : memref<256x1xf32, #tpu.memory_space<vmem>>, vector<256x1xf32>
    %52 = vector.broadcast %51 : vector<256x1xf32> to vector<256x128xf32>
    %53 = arith.addf %50, %52 : vector<256x128xf32>
    %cst_25 = arith.constant 0.000000e+00 : f32
    %54 = vector.broadcast %cst_25 : f32 to vector<256x128xf32>
    %55 = arith.maximumf %53, %54 : vector<256x128xf32>
    %c0_26 = arith.constant 0 : index
    %c0_27 = arith.constant 0 : index
    %c0_28 = arith.constant 0 : index
    %56 = vector.load %arg10[%c0_26, %c0_27, %c0_28] : memref<1x384x128xf32, #tpu.memory_space<vmem>>, vector<1x128x128xf32>
    %57 = vector.shape_cast %56 : vector<1x128x128xf32> to vector<128x128xf32>
    %58 = vector.shape_cast %3 : vector<128x128xf32> to vector<1x128x128xf32>
    tpu.vector_store %arg10[%c0_26, %c0_27, %c0_28], %58 {strides = array<i32>} : memref<1x384x128xf32, #tpu.memory_space<vmem>>, vector<1x128x128xf32>,
    %c0_29 = arith.constant 0 : index
    %c128 = arith.constant 128 : index
    %c0_30 = arith.constant 0 : index
    %59 = vector.load %arg10[%c0_29, %c128, %c0_30] : memref<1x384x128xf32, #tpu.memory_space<vmem>>, vector<1x256x128xf32>
    %60 = vector.shape_cast %59 : vector<1x256x128xf32> to vector<256x128xf32>
    %61 = vector.shape_cast %55 : vector<256x128xf32> to vector<1x256x128xf32>
    tpu.vector_store %arg10[%c0_29, %c128, %c0_30], %61 {strides = array<i32>} : memref<1x384x128xf32, #tpu.memory_space<vmem>>, vector<1x256x128xf32>,
    return
  }
  func.func @transform_0(%arg0: i32, %arg1: i32) -> (i32, i32, i32) {
    %c0_i32 = arith.constant 0 : i32
    %c0_i32_0 = arith.constant 0 : i32
    return %arg0, %c0_i32, %arg1 : i32, i32, i32
  }
  func.func @transform_1(%arg0: i32, %arg1: i32) -> (i32, i32, i32) {
    %c1_i32 = arith.constant 1 : i32
    %0 = arith.muli %arg1, %c1_i32 : i32
    %c1_i32_0 = arith.constant 1 : i32
    %1 = arith.subi %0, %c1_i32_0 : i32
    %c0_i32 = arith.constant 0 : i32
    %2 = arith.maxsi %1, %c0_i32 : i32
    %c0_i32_1 = arith.constant 0 : i32
    %c0_i32_2 = arith.constant 0 : i32
    return %arg0, %c0_i32_1, %2 : i32, i32, i32
  }
  func.func @transform_2(%arg0: i32, %arg1: i32) -> (i32, i32, i32) {
    %c1_i32 = arith.constant 1 : i32
    %0 = arith.addi %arg1, %c1_i32 : i32
    %c1_i32_0 = arith.constant 1 : i32
    %1 = arith.muli %0, %c1_i32_0 : i32
    %c1_i32_1 = arith.constant 1 : i32
    %2 = arith.minsi %1, %c1_i32_1 : i32
    %c0_i32 = arith.constant 0 : i32
    %c0_i32_2 = arith.constant 0 : i32
    return %arg0, %c0_i32, %2 : i32, i32, i32
  }
  func.func @transform_3(%arg0: i32, %arg1: i32) -> (i32, i32) {
    %c0_i32 = arith.constant 0 : i32
    %c0_i32_0 = arith.constant 0 : i32
    %c0_i32_1 = arith.constant 0 : i32
    return %c0_i32, %c0_i32_0 : i32, i32
  }
  func.func @transform_4(%arg0: i32, %arg1: i32) -> (i32, i32) {
    %c0_i32 = arith.constant 0 : i32
    %c0_i32_0 = arith.constant 0 : i32
    %c0_i32_1 = arith.constant 0 : i32
    return %c0_i32, %c0_i32_0 : i32, i32
  }
  func.func @transform_5(%arg0: i32, %arg1: i32) -> (i32, i32) {
    %c0_i32 = arith.constant 0 : i32
    %c0_i32_0 = arith.constant 0 : i32
    %c0_i32_1 = arith.constant 0 : i32
    return %c0_i32, %c0_i32_0 : i32, i32
  }
  func.func @transform_6(%arg0: i32, %arg1: i32) -> (i32, i32) {
    %c0_i32 = arith.constant 0 : i32
    %c0_i32_0 = arith.constant 0 : i32
    %c0_i32_1 = arith.constant 0 : i32
    return %c0_i32, %c0_i32_0 : i32, i32
  }
  func.func @transform_7(%arg0: i32, %arg1: i32) -> (i32, i32) {
    %c0_i32 = arith.constant 0 : i32
    %c0_i32_0 = arith.constant 0 : i32
    %c0_i32_1 = arith.constant 0 : i32
    return %c0_i32, %c0_i32_0 : i32, i32
  }
  func.func @transform_8(%arg0: i32, %arg1: i32) -> (i32, i32, i32) {
    %c0_i32 = arith.constant 0 : i32
    %c0_i32_0 = arith.constant 0 : i32
    return %arg0, %c0_i32, %arg1 : i32, i32, i32
  }
}

</mosaic_0001>

<llo_original>
// kernel: tpu_custom_call.1
$region0: #{tpu_custom_call.1}
  #allocation0 [shape = 'u32[]', space=smem, size = 0x4, offset = 0x4, fixed_abs, tag = 'smem constant byte address 0x4 - core index']
  #allocation1 [shape = 'u32[72,128]{1,0:T(1,128)}', space=vmem, size = 0x9000, scoped, tag = 'internal scratch']
  %s0 = inlined_call_operand.vmem [shape: f32[2,128,256], index: 0, kind: input, shape index: {}]
  %s1 = inlined_call_operand.vmem [shape: f32[2,128,256], index: 1, kind: input, shape index: {}]
  %s2 = inlined_call_operand.hbm [shape: f32[2,128,256], index: 2, kind: input, shape index: {}]
  %s3 = inlined_call_operand.vmem [shape: f32[2,128], index: 3, kind: input, shape index: {}]
  %s4 = inlined_call_operand.vmem [shape: f32[32,128], index: 4, kind: input, shape index: {}]
  %s5 = inlined_call_operand.vmem [shape: f32[32,1], index: 5, kind: input, shape index: {}]
  %s6 = inlined_call_operand.vmem [shape: f32[256,160], index: 6, kind: input, shape index: {}]
  %s7 = inlined_call_operand.vmem [shape: f32[256,1], index: 7, kind: input, shape index: {}]
  %s8 = inlined_call_operand.hbm [shape: f32[2,384,256], index: 8, kind: output, shape index: {}]
  %s9 = sld [smem:[#allocation0]]
  $region145: #{tpu_custom_call.1} parent=0
    _
  %s11 = ssub.s32 1, %s9
  %s12 = scalar_select 0, %s11, %s9
  $region1: #{tpu_custom_call.1} parent=0
    #allocation2 [shape = 'u8[131072]{0}', space=vmem, size = 0x20000, scoped, tag = 'input window, operand 0']
    #allocation3 [shape = 'u8[131072]{0}', space=vmem, size = 0x20000, scoped, tag = 'input window, operand 1']
    #allocation4 [shape = 'u8[131072]{0}', space=vmem, size = 0x20000, scoped, tag = 'input window, operand 2']
    #allocation5 [shape = 's32[2]{0}', space=sflag, size = 0x8, scoped, tag = 'scoped memory for tpu_custom_call.1']
    #allocation6 [shape = 's32[2]{0}', space=sflag, size = 0x8, scoped, tag = 'scoped memory for tpu_custom_call.1']
    #allocation7 [shape = 'u8[393216]{0}', space=vmem, size = 0x60000, scoped, tag = 'output window, operand 0']
    %13 = vsyncpa [#allocation5], 0
    %s14 = scalar_lea.sflag [#allocation5], 1
    %15 = vsyncpa %s14, 0
    %16 = vsyncpa [#allocation6], 0
    %s17 = scalar_lea.sflag [#allocation6], 1
    %18 = vsyncpa %s17, 0
    loop: start=0, step=1, limit=6
    $region2: #{tpu_custom_call.1} parent=1 // loop_pre_header
      _
    $region3: #{tpu_custom_call.1} parent=1 // loop_header
      %s20 = sphi 0, %s24
      %p21 = scmp.ge.s32.totalorder %s20, 6
      %s27 = sphi 0, %s39
      %s28 = sphi 0, %s35
      %s29 = sphi 0, %s27
      %s30 = sphi 0, %s28
      %s31 = sphi 0, %s29
      %s32 = sphi 0, %s30
      %s44 = sphi 0, %s46
      %s47 = sphi 0, %s44
      %s48 = sphi 0, %s47
      %s64 = sphi 0, %s48
      %s78 = sphi 0, %s80
      %s81 = sphi 0, %s78
      %s82 = sphi 0, %s81
      %s98 = sphi 0, %s82
      %s112 = sphi 0, %s114
      %s115 = sphi 0, %s112
      %s116 = sphi 0, %s115
      %s132 = sphi 0, %s116
      %s136 = sphi 0, %s136
      %s138 = sphi 0, %s136
      %s139 = sphi 0, %s138
      %s153 = sphi 0, %s139
      %s157 = sphi 0, %s157
      %s159 = sphi 0, %s157
      %s160 = sphi 0, %s159
      %s174 = sphi 0, %s160
      %s178 = sphi 0, %s178
      %s180 = sphi 0, %s178
      %s181 = sphi 0, %s180
      %s195 = sphi 0, %s181
      %s199 = sphi 0, %s199
      %s201 = sphi 0, %s199
      %s202 = sphi 0, %s201
      %s216 = sphi 0, %s202
      %s220 = sphi 0, %s220
      %s222 = sphi 0, %s220
      %s223 = sphi 0, %s222
      %s237 = sphi 0, %s223
      %s245 = sphi 0, %s247
      %s248 = sphi 0, %s245
      %s249 = sphi 0, %s248
      %s265 = sphi 0, %s249
    $region4: #{tpu_custom_call.1} parent=1 // loop_header_branch
      %23 = sbr.rel (%p21) target = $region8
    $region5: #{tpu_custom_call.1} parent=1 // loop_body
      %s25 = ssub.s32 %s20, 1
      %s26 = ssub.s32 %s20, 2
      %s33 = sadd.s32 1, %s28
      %p34 = scmp.ge.s32.totalorder %s33, 2
      %s35 = scalar_select %p34, 0, %s33
      %s36 = sadd.s32 1, %s27
      %s37 = scalar_select %p34, %s36, %s27
      %p38 = scmp.ge.s32.totalorder %s37, 2
      %s39 = scalar_select %p38, 0, %s37
      %s40 = ssub.s32 %s27, %s39
      %s41 = ssub.s32 %s28, %s35
      %s42 = sor.u32 %s40, %s41
      %p43 = scmp.eq.s32.totalorder %s42, 0
      %s45 = sadd.s32 %s44, 1
      %s46 = scalar_select %p43, %s44, %s45
      %p49 = pneg %p43
      %p50 = scmp.eq.s32.totalorder %s20, 3
      %p51 = por %p49, %p50
      %p52 = scmp.ne.s32.totalorder %s44, %s47
      %p53 = scmp.eq.s32.totalorder %s20, 0
      %p54 = por %p52, %p53
      %p55 = scmp.ne.s32.totalorder %s44, %s47
      %p56 = scmp.eq.s32.totalorder %s25, 3
      %p57 = por %p55, %p56
      %p58 = scmp.ne.s32.totalorder %s47, %s48
      %p59 = scmp.eq.s32.totalorder %s25, 0
      %p60 = por %p58, %p59
      %p61 = scmp.ne.s32.totalorder %s47, %s48
      %p62 = scmp.eq.s32.totalorder %s26, 3
      %p63 = por %p61, %p62
      %p65 = scmp.ne.s32.totalorder %s48, %s64
      %p66 = scmp.eq.s32.totalorder %s26, 0
      %p67 = por %p65, %p66
      %s68 = ssub.s32 %s28, 1
      %p69 = scmp.gt.s32.totalorder %s68, 0
      %s70 = scalar_select %p69, %s68, 0
      %s71 = ssub.s32 %s35, 1
      %p72 = scmp.gt.s32.totalorder %s71, 0
      %s73 = scalar_select %p72, %s71, 0
      %s74 = ssub.s32 %s27, %s39
      %s75 = ssub.s32 %s70, %s73
      %s76 = sor.u32 %s74, %s75
      %p77 = scmp.eq.s32.totalorder %s76, 0
      %s79 = sadd.s32 %s78, 1
      %s80 = scalar_select %p77, %s78, %s79
      %p83 = pneg %p77
      %p84 = scmp.eq.s32.totalorder %s20, 3
      %p85 = por %p83, %p84
      %p86 = scmp.ne.s32.totalorder %s78, %s81
      %p87 = scmp.eq.s32.totalorder %s20, 0
      %p88 = por %p86, %p87
      %p89 = scmp.ne.s32.totalorder %s78, %s81
      %p90 = scmp.eq.s32.totalorder %s25, 3
      %p91 = por %p89, %p90
      %p92 = scmp.ne.s32.totalorder %s81, %s82
      %p93 = scmp.eq.s32.totalorder %s25, 0
      %p94 = por %p92, %p93
      %p95 = scmp.ne.s32.totalorder %s81, %s82
      %p96 = scmp.eq.s32.totalorder %s26, 3
      %p97 = por %p95, %p96
      %p99 = scmp.ne.s32.totalorder %s82, %s98
      %p100 = scmp.eq.s32.totalorder %s26, 0
      %p101 = por %p99, %p100
      %s102 = sadd.s32 %s28, 1
      %p103 = scmp.lt.s32.totalorder %s102, 1
      %s104 = scalar_select %p103, %s102, 1
      %s105 = sadd.s32 %s35, 1
      %p106 = scmp.lt.s32.totalorder %s105, 1
      %s107 = scalar_select %p106, %s105, 1
      %s108 = ssub.s32 %s27, %s39
      %s109 = ssub.s32 %s104, %s107
      %s110 = sor.u32 %s108, %s109
      %p111 = scmp.eq.s32.totalorder %s110, 0
      %s113 = sadd.s32 %s112, 1
      %s114 = scalar_select %p111, %s112, %s113
      %p117 = pneg %p111
      %p118 = scmp.eq.s32.totalorder %s20, 3
      %p119 = por %p117, %p118
      %p120 = scmp.ne.s32.totalorder %s112, %s115
      %p121 = scmp.eq.s32.totalorder %s20, 0
      %p122 = por %p120, %p121
      %p123 = scmp.ne.s32.totalorder %s112, %s115
      %p124 = scmp.eq.s32.totalorder %s25, 3
      %p125 = por %p123, %p124
      %p126 = scmp.ne.s32.totalorder %s115, %s116
      %p127 = scmp.eq.s32.totalorder %s25, 0
      %p128 = por %p126, %p127
      %p129 = scmp.ne.s32.totalorder %s115, %s116
      %p130 = scmp.eq.s32.totalorder %s26, 3
      %p131 = por %p129, %p130
      %p133 = scmp.ne.s32.totalorder %s116, %s132
      %p134 = scmp.eq.s32.totalorder %s26, 0
      %p135 = por %p133, %p134
      %s137 = sadd.s32 %s136, 1
      %p140 = scmp.eq.s32.totalorder %s20, 3
      %p141 = scmp.ne.s32.totalorder %s136, %s138
      %p142 = scmp.eq.s32.totalorder %s20, 0
      %p143 = por %p141, %p142
      %p144 = scmp.ne.s32.totalorder %s136, %s138
      %p145 = scmp.eq.s32.totalorder %s25, 3
      %p146 = por %p144, %p145
      %p147 = scmp.ne.s32.totalorder %s138, %s139
      %p148 = scmp.eq.s32.totalorder %s25, 0
      %p149 = por %p147, %p148
      %p150 = scmp.ne.s32.totalorder %s138, %s139
      %p151 = scmp.eq.s32.totalorder %s26, 3
      %p152 = por %p150, %p151
      %p154 = scmp.ne.s32.totalorder %s139, %s153
      %p155 = scmp.eq.s32.totalorder %s26, 0
      %p156 = por %p154, %p155
      %s158 = sadd.s32 %s157, 1
      %p161 = scmp.eq.s32.totalorder %s20, 3
      %p162 = scmp.ne.s32.totalorder %s157, %s159
      %p163 = scmp.eq.s32.totalorder %s20, 0
      %p164 = por %p162, %p163
      %p165 = scmp.ne.s32.totalorder %s157, %s159
      %p166 = scmp.eq.s32.totalorder %s25, 3
      %p167 = por %p165, %p166
      %p168 = scmp.ne.s32.totalorder %s159, %s160
      %p169 = scmp.eq.s32.totalorder %s25, 0
      %p170 = por %p168, %p169
      %p171 = scmp.ne.s32.totalorder %s159, %s160
      %p172 = scmp.eq.s32.totalorder %s26, 3
      %p173 = por %p171, %p172
      %p175 = scmp.ne.s32.totalorder %s160, %s174
      %p176 = scmp.eq.s32.totalorder %s26, 0
      %p177 = por %p175, %p176
      %s179 = sadd.s32 %s178, 1
      %p182 = scmp.eq.s32.totalorder %s20, 3
      %p183 = scmp.ne.s32.totalorder %s178, %s180
      %p184 = scmp.eq.s32.totalorder %s20, 0
      %p185 = por %p183, %p184
      %p186 = scmp.ne.s32.totalorder %s178, %s180
      %p187 = scmp.eq.s32.totalorder %s25, 3
      %p188 = por %p186, %p187
      %p189 = scmp.ne.s32.totalorder %s180, %s181
      %p190 = scmp.eq.s32.totalorder %s25, 0
      %p191 = por %p189, %p190
      %p192 = scmp.ne.s32.totalorder %s180, %s181
      %p193 = scmp.eq.s32.totalorder %s26, 3
      %p194 = por %p192, %p193
      %p196 = scmp.ne.s32.totalorder %s181, %s195
      %p197 = scmp.eq.s32.totalorder %s26, 0
      %p198 = por %p196, %p197
      %s200 = sadd.s32 %s199, 1
      %p203 = scmp.eq.s32.totalorder %s20, 3
      %p204 = scmp.ne.s32.totalorder %s199, %s201
      %p205 = scmp.eq.s32.totalorder %s20, 0
      %p206 = por %p204, %p205
      %p207 = scmp.ne.s32.totalorder %s199, %s201
      %p208 = scmp.eq.s32.totalorder %s25, 3
      %p209 = por %p207, %p208
      %p210 = scmp.ne.s32.totalorder %s201, %s202
      %p211 = scmp.eq.s32.totalorder %s25, 0
      %p212 = por %p210, %p211
      %p213 = scmp.ne.s32.totalorder %s201, %s202
      %p214 = scmp.eq.s32.totalorder %s26, 3
      %p215 = por %p213, %p214
      %p217 = scmp.ne.s32.totalorder %s202, %s216
      %p218 = scmp.eq.s32.totalorder %s26, 0
      %p219 = por %p217, %p218
      %s221 = sadd.s32 %s220, 1
      %p224 = scmp.eq.s32.totalorder %s20, 3
      %p225 = scmp.ne.s32.totalorder %s220, %s222
      %p226 = scmp.eq.s32.totalorder %s20, 0
      %p227 = por %p225, %p226
      %p228 = scmp.ne.s32.totalorder %s220, %s222
      %p229 = scmp.eq.s32.totalorder %s25, 3
      %p230 = por %p228, %p229
      %p231 = scmp.ne.s32.totalorder %s222, %s223
      %p232 = scmp.eq.s32.totalorder %s25, 0
      %p233 = por %p231, %p232
      %p234 = scmp.ne.s32.totalorder %s222, %s223
      %p235 = scmp.eq.s32.totalorder %s26, 3
      %p236 = por %p234, %p235
      %p238 = scmp.ne.s32.totalorder %s223, %s237
      %p239 = scmp.eq.s32.totalorder %s26, 0
      %p240 = por %p238, %p239
      %s241 = ssub.s32 %s27, %s39
      %s242 = ssub.s32 %s28, %s35
      %s243 = sor.u32 %s241, %s242
      %p244 = scmp.eq.s32.totalorder %s243, 0
      %s246 = sadd.s32 %s245, 1
      %s247 = scalar_select %p244, %s245, %s246
      %p250 = pneg %p244
      %p251 = scmp.eq.s32.totalorder %s20, 3
      %p252 = por %p250, %p251
      %p253 = scmp.ne.s32.totalorder %s245, %s248
      %p254 = scmp.eq.s32.totalorder %s20, 0
      %p255 = por %p253, %p254
      %p256 = scmp.ne.s32.totalorder %s245, %s248
      %p257 = scmp.eq.s32.totalorder %s25, 3
      %p258 = por %p256, %p257
      %p259 = scmp.ne.s32.totalorder %s248, %s249
      %p260 = scmp.eq.s32.totalorder %s25, 0
      %p261 = por %p259, %p260
      %p262 = scmp.ne.s32.totalorder %s248, %s249
      %p263 = scmp.eq.s32.totalorder %s26, 3
      %p264 = por %p262, %p263
      %p266 = scmp.ne.s32.totalorder %s249, %s265
      %p267 = scmp.eq.s32.totalorder %s26, 0
      %p268 = por %p266, %p267
      %p269 = scmp.le.s32.totalorder 1, %s20
      %p270 = scmp.lt.s32.totalorder %s20, 5
      %p271 = pnand %p269, %p270
      %p272 = pneg %p271
      // Predicated region
      $region9: #{tpu_custom_call.1} parent=5 // pred_check
        _
      $region10: #{tpu_custom_call.1} parent=5 // pred_check_branch
        %274 = sbr.rel (%p271) target = $region12
      $region11: #{tpu_custom_call.1} parent=5 // pred_region
        %s275 = ssub.s32 %s20, 1
        // Predicated region
        $region13: #{tpu_custom_call.1} parent=11 // pred_check
          %p276 = pneg %p149
        $region14: #{tpu_custom_call.1} parent=11 // pred_check_branch
          %278 = sbr.rel (%p276) target = $region16
        $region15: #{tpu_custom_call.1} parent=11 // pred_region
          _
        $region16: #{tpu_custom_call.1} parent=11 // pred_fallthru
          _
        // Predicated region
        $region17: #{tpu_custom_call.1} parent=11 // pred_check
          %p279 = pneg %p170
        $region18: #{tpu_custom_call.1} parent=11 // pred_check_branch
          %281 = sbr.rel (%p279) target = $region20
        $region19: #{tpu_custom_call.1} parent=11 // pred_region
          _
        $region20: #{tpu_custom_call.1} parent=11 // pred_fallthru
          _
        // Predicated region
        $region21: #{tpu_custom_call.1} parent=11 // pred_check
          %p282 = pneg %p191
        $region22: #{tpu_custom_call.1} parent=11 // pred_check_branch
          %284 = sbr.rel (%p282) target = $region24
        $region23: #{tpu_custom_call.1} parent=11 // pred_region
          _
        $region24: #{tpu_custom_call.1} parent=11 // pred_fallthru
          _
        // Predicated region
        $region25: #{tpu_custom_call.1} parent=11 // pred_check
          %p285 = pneg %p212
        $region26: #{tpu_custom_call.1} parent=11 // pred_check_branch
          %287 = sbr.rel (%p285) target = $region28
        $region27: #{tpu_custom_call.1} parent=11 // pred_region
          _
        $region28: #{tpu_custom_call.1} parent=11 // pred_fallthru
          _
        // Predicated region
        $region29: #{tpu_custom_call.1} parent=11 // pred_check
          %p288 = pneg %p233
        $region30: #{tpu_custom_call.1} parent=11 // pred_check_branch
          %290 = sbr.rel (%p288) target = $region32
        $region31: #{tpu_custom_call.1} parent=11 // pred_region
          _
        $region32: #{tpu_custom_call.1} parent=11 // pred_fallthru
          _
      $region12: #{tpu_custom_call.1} parent=5 // pred_fallthru
        _
      %p291 = scmp.lt.s32.totalorder %s20, 4
      // Predicated region
      $region33: #{tpu_custom_call.1} parent=5 // pred_check
        %p292 = pneg %p291
      $region34: #{tpu_custom_call.1} parent=5 // pred_check_branch
        %294 = sbr.rel (%p292) target = $region36
      $region35: #{tpu_custom_call.1} parent=5 // pred_region
        // Predicated region
        $region37: #{tpu_custom_call.1} parent=35 // pred_check
          %p295 = pneg %p54
        $region38: #{tpu_custom_call.1} parent=35 // pred_check_branch
          %297 = sbr.rel (%p295) target = $region40
        $region39: #{tpu_custom_call.1} parent=35 // pred_region
          %s298 = sand.u32 %s44, 1
          %s299 = sand.u32 %s44, 1
          %s300 = smul.addr %s299, 128
          %s301 = scalar_lea.vmem [#allocation2], %s300
          %s302 = smul.addr %s27, 32
          %s303 = sadd.s32 %s28, %s302
          %s304 = smul.addr %s303, 8
          %s305 = scalar_lea.vmem %s0, %s304
          // Predicated region
          $region41: #{tpu_custom_call.1} parent=39 // pred_check
            _
          $region42: #{tpu_custom_call.1} parent=39 // pred_check_branch
            %307 = sbr.rel (0) target = $region44
          $region43: #{tpu_custom_call.1} parent=39 // pred_region
            // Predicated region
            $region45: #{tpu_custom_call.1} parent=43 // pred_check
              _
            $region46: #{tpu_custom_call.1} parent=43 // pred_check_branch
              %309 = sbr.rel (0) target = $region48
            $region47: #{tpu_custom_call.1} parent=43 // pred_region
              // Predicated region
              $region60: #{tpu_custom_call.1} parent=47 // pred_check
                _
              $region61: #{tpu_custom_call.1} parent=47 // pred_check_branch
                %355 = sbr.rel (0) target = $region63
              $region62: #{tpu_custom_call.1} parent=47 // pred_region
                loop: start=0, step=1, limit=1
                $region64: #{tpu_custom_call.1} parent=62 // loop_pre_header
                  _
                $region65: #{tpu_custom_call.1} parent=62 // loop_header
                  %s357 = sphi 0, %s361
                  %p358 = scmp.ge.s32.totalorder %s357, 1
                  %s362 = sphi %s305, %s305
                  %s363 = sphi %s301, %s301
                $region66: #{tpu_custom_call.1} parent=62 // loop_header_branch
                  %360 = sbr.rel (%p358) target = $region70
                $region67: #{tpu_custom_call.1} parent=62 // loop_body
                  %v364 = vld [vmem:[%s362] sm:$0xff]
                  %365 = vst [vmem:[%s363] sm:$0xff] %v364
                  %v366 = vld [vmem:[%s362 + $0x10] sm:$0xff]
                  %367 = vst [vmem:[%s363 + $0x8] sm:$0xff] %v366
                  %v368 = vld [vmem:[%s362 + $0x20] sm:$0xff]
                  %369 = vst [vmem:[%s363 + $0x10] sm:$0xff] %v368
                  %v370 = vld [vmem:[%s362 + $0x30] sm:$0xff]
                  %371 = vst [vmem:[%s363 + $0x18] sm:$0xff] %v370
                  %v372 = vld [vmem:[%s362 + $0x40] sm:$0xff]
                  %373 = vst [vmem:[%s363 + $0x20] sm:$0xff] %v372
                  %v374 = vld [vmem:[%s362 + $0x50] sm:$0xff]
                  %375 = vst [vmem:[%s363 + $0x28] sm:$0xff] %v374
                  %v376 = vld [vmem:[%s362 + $0x60] sm:$0xff]
                  %377 = vst [vmem:[%s363 + $0x30] sm:$0xff] %v376
                  %v378 = vld [vmem:[%s362 + $0x70] sm:$0xff]
                  %379 = vst [vmem:[%s363 + $0x38] sm:$0xff] %v378
                  %v380 = vld [vmem:[%s362 + $0x80] sm:$0xff]
                  %381 = vst [vmem:[%s363 + $0x40] sm:$0xff] %v380
                  %v382 = vld [vmem:[%s362 + $0x90] sm:$0xff]
                  %383 = vst [vmem:[%s363 + $0x48] sm:$0xff] %v382
                  %v384 = vld [vmem:[%s362 + $0xa0] sm:$0xff]
                  %385 = vst [vmem:[%s363 + $0x50] sm:$0xff] %v384
                  %v386 = vld [vmem:[%s362 + $0xb0] sm:$0xff]
                  %387 = vst [vmem:[%s363 + $0x58] sm:$0xff] %v386
                  %v388 = vld [vmem:[%s362 + $0xc0] sm:$0xff]
                  %389 = vst [vmem:[%s363 + $0x60] sm:$0xff] %v388
                  %v390 = vld [vmem:[%s362 + $0xd0] sm:$0xff]
                  %391 = vst [vmem:[%s363 + $0x68] sm:$0xff] %v390
                  %v392 = vld [vmem:[%s362 + $0xe0] sm:$0xff]
                  %393 = vst [vmem:[%s363 + $0x70] sm:$0xff] %v392
                  %v394 = vld [vmem:[%s362 + $0xf0] sm:$0xff]
                  %395 = vst [vmem:[%s363 + $0x78] sm:$0xff] %v394
                $region68: #{tpu_custom_call.1} parent=62 // loop_footer
                  %s361 = sadd.s32 1, %s357
                $region69: #{tpu_custom_call.1} parent=62 // loop_footer_branch
                  %356 = sbr.rel target = $region65
                $region70: #{tpu_custom_call.1} parent=62 // loop_exit
                  _
              $region63: #{tpu_custom_call.1} parent=47 // pred_fallthru
                _
              // Predicated region
              $region71: #{tpu_custom_call.1} parent=47 // pred_check
                _
              $region72: #{tpu_custom_call.1} parent=47 // pred_check_branch
                %397 = sbr.rel target = $region74
              $region73: #{tpu_custom_call.1} parent=47 // pred_region
                _
              $region74: #{tpu_custom_call.1} parent=47 // pred_fallthru
                _
            $region48: #{tpu_custom_call.1} parent=43 // pred_fallthru
              _
            // Predicated region
            $region49: #{tpu_custom_call.1} parent=43 // pred_check
              _
            $region50: #{tpu_custom_call.1} parent=43 // pred_check_branch
              %311 = sbr.rel target = $region52
            $region51: #{tpu_custom_call.1} parent=43 // pred_region
              %s313 = ssub.s32 256, 1
              loop: start=0, step=1, limit=1
              $region53: #{tpu_custom_call.1} parent=51 // loop_pre_header
                _
              $region54: #{tpu_custom_call.1} parent=51 // loop_header
                %s315 = sphi 0, %s319
                %p316 = scmp.ge.s32.totalorder %s315, 1
                %s320 = sphi %s305, %s305
                %s321 = sphi %s301, %s301
              $region55: #{tpu_custom_call.1} parent=51 // loop_header_branch
                %318 = sbr.rel (%p316) target = $region59
              $region56: #{tpu_custom_call.1} parent=51 // loop_body
                %v322 = vld [vmem:[%s320] sm:%s313]
                %323 = vst [vmem:[%s321] sm:%s313] %v322
                %v324 = vld [vmem:[%s320 + $0x10] sm:%s313]
                %325 = vst [vmem:[%s321 + $0x8] sm:%s313] %v324
                %v326 = vld [vmem:[%s320 + $0x20] sm:%s313]
                %327 = vst [vmem:[%s321 + $0x10] sm:%s313] %v326
                %v328 = vld [vmem:[%s320 + $0x30] sm:%s313]
                %329 = vst [vmem:[%s321 + $0x18] sm:%s313] %v328
                %v330 = vld [vmem:[%s320 + $0x40] sm:%s313]
                %331 = vst [vmem:[%s321 + $0x20] sm:%s313] %v330
                %v332 = vld [vmem:[%s320 + $0x50] sm:%s313]
                %333 = vst [vmem:[%s321 + $0x28] sm:%s313] %v332
                %v334 = vld [vmem:[%s320 + $0x60] sm:%s313]
                %335 = vst [vmem:[%s321 + $0x30] sm:%s313] %v334
                %v336 = vld [vmem:[%s320 + $0x70] sm:%s313]
                %337 = vst [vmem:[%s321 + $0x38] sm:%s313] %v336
                %v338 = vld [vmem:[%s320 + $0x80] sm:%s313]
                %339 = vst [vmem:[%s321 + $0x40] sm:%s313] %v338
                %v340 = vld [vmem:[%s320 + $0x90] sm:%s313]
                %341 = vst [vmem:[%s321 + $0x48] sm:%s313] %v340
                %v342 = vld [vmem:[%s320 + $0xa0] sm:%s313]
                %343 = vst [vmem:[%s321 + $0x50] sm:%s313] %v342
                %v344 = vld [vmem:[%s320 + $0xb0] sm:%s313]
                %345 = vst [vmem:[%s321 + $0x58] sm:%s313] %v344
                %v346 = vld [vmem:[%s320 + $0xc0] sm:%s313]
                %347 = vst [vmem:[%s321 + $0x60] sm:%s313] %v346
                %v348 = vld [vmem:[%s320 + $0xd0] sm:%s313]
                %349 = vst [vmem:[%s321 + $0x68] sm:%s313] %v348
                %v350 = vld [vmem:[%s320 + $0xe0] sm:%s313]
                %351 = vst [vmem:[%s321 + $0x70] sm:%s313] %v350
                %v352 = vld [vmem:[%s320 + $0xf0] sm:%s313]
                %353 = vst [vmem:[%s321 + $0x78] sm:%s313] %v352
              $region57: #{tpu_custom_call.1} parent=51 // loop_footer
                %s319 = sadd.s32 1, %s315
              $region58: #{tpu_custom_call.1} parent=51 // loop_footer_branch
                %314 = sbr.rel target = $region54
              $region59: #{tpu_custom_call.1} parent=51 // loop_exit
                _
            $region52: #{tpu_custom_call.1} parent=43 // pred_fallthru
              _
          $region44: #{tpu_custom_call.1} parent=39 // pred_fallthru
            _
          %398 = vnop
        $region40: #{tpu_custom_call.1} parent=35 // pred_fallthru
          _
        // Predicated region
        $region75: #{tpu_custom_call.1} parent=35 // pred_check
          %p399 = pneg %p88
        $region76: #{tpu_custom_call.1} parent=35 // pred_check_branch
          %401 = sbr.rel (%p399) target = $region78
        $region77: #{tpu_custom_call.1} parent=35 // pred_region
          %s402 = sand.u32 %s78, 1
          %s403 = sand.u32 %s78, 1
          %s404 = smul.addr %s403, 128
          %s405 = scalar_lea.vmem [#allocation3], %s404
          %s406 = ssub.s32 %s28, 1
          %p407 = scmp.gt.s32.totalorder %s406, 0
          %s408 = scalar_select %p407, %s406, 0
          %s409 = smul.addr %s27, 32
          %s410 = sadd.s32 %s408, %s409
          %s411 = smul.addr %s410, 8
          %s412 = scalar_lea.vmem %s1, %s411
          // Predicated region
          $region79: #{tpu_custom_call.1} parent=77 // pred_check
            _
          $region80: #{tpu_custom_call.1} parent=77 // pred_check_branch
            %414 = sbr.rel (0) target = $region82
          $region81: #{tpu_custom_call.1} parent=77 // pred_region
            // Predicated region
            $region83: #{tpu_custom_call.1} parent=81 // pred_check
              _
            $region84: #{tpu_custom_call.1} parent=81 // pred_check_branch
              %416 = sbr.rel (0) target = $region86
            $region85: #{tpu_custom_call.1} parent=81 // pred_region
              // Predicated region
              $region98: #{tpu_custom_call.1} parent=85 // pred_check
                _
              $region99: #{tpu_custom_call.1} parent=85 // pred_check_branch
                %462 = sbr.rel (0) target = $region101
              $region100: #{tpu_custom_call.1} parent=85 // pred_region
                loop: start=0, step=1, limit=1
                $region102: #{tpu_custom_call.1} parent=100 // loop_pre_header
                  _
                $region103: #{tpu_custom_call.1} parent=100 // loop_header
                  %s464 = sphi 0, %s468
                  %p465 = scmp.ge.s32.totalorder %s464, 1
                  %s469 = sphi %s412, %s412
                  %s470 = sphi %s405, %s405
                $region104: #{tpu_custom_call.1} parent=100 // loop_header_branch
                  %467 = sbr.rel (%p465) target = $region108
                $region105: #{tpu_custom_call.1} parent=100 // loop_body
                  %v471 = vld [vmem:[%s469] sm:$0xff]
                  %472 = vst [vmem:[%s470] sm:$0xff] %v471
                  %v473 = vld [vmem:[%s469 + $0x10] sm:$0xff]
                  %474 = vst [vmem:[%s470 + $0x8] sm:$0xff] %v473
                  %v475 = vld [vmem:[%s469 + $0x20] sm:$0xff]
                  %476 = vst [vmem:[%s470 + $0x10] sm:$0xff] %v475
                  %v477 = vld [vmem:[%s469 + $0x30] sm:$0xff]
                  %478 = vst [vmem:[%s470 + $0x18] sm:$0xff] %v477
                  %v479 = vld [vmem:[%s469 + $0x40] sm:$0xff]
                  %480 = vst [vmem:[%s470 + $0x20] sm:$0xff] %v479
                  %v481 = vld [vmem:[%s469 + $0x50] sm:$0xff]
                  %482 = vst [vmem:[%s470 + $0x28] sm:$0xff] %v481
                  %v483 = vld [vmem:[%s469 + $0x60] sm:$0xff]
                  %484 = vst [vmem:[%s470 + $0x30] sm:$0xff] %v483
                  %v485 = vld [vmem:[%s469 + $0x70] sm:$0xff]
                  %486 = vst [vmem:[%s470 + $0x38] sm:$0xff] %v485
                  %v487 = vld [vmem:[%s469 + $0x80] sm:$0xff]
                  %488 = vst [vmem:[%s470 + $0x40] sm:$0xff] %v487
                  %v489 = vld [vmem:[%s469 + $0x90] sm:$0xff]
                  %490 = vst [vmem:[%s470 + $0x48] sm:$0xff] %v489
                  %v491 = vld [vmem:[%s469 + $0xa0] sm:$0xff]
                  %492 = vst [vmem:[%s470 + $0x50] sm:$0xff] %v491
                  %v493 = vld [vmem:[%s469 + $0xb0] sm:$0xff]
                  %494 = vst [vmem:[%s470 + $0x58] sm:$0xff] %v493
                  %v495 = vld [vmem:[%s469 + $0xc0] sm:$0xff]
                  %496 = vst [vmem:[%s470 + $0x60] sm:$0xff] %v495
                  %v497 = vld [vmem:[%s469 + $0xd0] sm:$0xff]
                  %498 = vst [vmem:[%s470 + $0x68] sm:$0xff] %v497
                  %v499 = vld [vmem:[%s469 + $0xe0] sm:$0xff]
                  %500 = vst [vmem:[%s470 + $0x70] sm:$0xff] %v499
                  %v501 = vld [vmem:[%s469 + $0xf0] sm:$0xff]
                  %502 = vst [vmem:[%s470 + $0x78] sm:$0xff] %v501
                $region106: #{tpu_custom_call.1} parent=100 // loop_footer
                  %s468 = sadd.s32 1, %s464
                $region107: #{tpu_custom_call.1} parent=100 // loop_footer_branch
                  %463 = sbr.rel target = $region103
                $region108: #{tpu_custom_call.1} parent=100 // loop_exit
                  _
              $region101: #{tpu_custom_call.1} parent=85 // pred_fallthru
                _
              // Predicated region
              $region109: #{tpu_custom_call.1} parent=85 // pred_check
                _
              $region110: #{tpu_custom_call.1} parent=85 // pred_check_branch
                %504 = sbr.rel target = $region112
              $region111: #{tpu_custom_call.1} parent=85 // pred_region
                _
              $region112: #{tpu_custom_call.1} parent=85 // pred_fallthru
                _
            $region86: #{tpu_custom_call.1} parent=81 // pred_fallthru
              _
            // Predicated region
            $region87: #{tpu_custom_call.1} parent=81 // pred_check
              _
            $region88: #{tpu_custom_call.1} parent=81 // pred_check_branch
              %418 = sbr.rel target = $region90
            $region89: #{tpu_custom_call.1} parent=81 // pred_region
              %s420 = ssub.s32 256, 1
              loop: start=0, step=1, limit=1
              $region91: #{tpu_custom_call.1} parent=89 // loop_pre_header
                _
              $region92: #{tpu_custom_call.1} parent=89 // loop_header
                %s422 = sphi 0, %s426
                %p423 = scmp.ge.s32.totalorder %s422, 1
                %s427 = sphi %s412, %s412
                %s428 = sphi %s405, %s405
              $region93: #{tpu_custom_call.1} parent=89 // loop_header_branch
                %425 = sbr.rel (%p423) target = $region97
              $region94: #{tpu_custom_call.1} parent=89 // loop_body
                %v429 = vld [vmem:[%s427] sm:%s420]
                %430 = vst [vmem:[%s428] sm:%s420] %v429
                %v431 = vld [vmem:[%s427 + $0x10] sm:%s420]
                %432 = vst [vmem:[%s428 + $0x8] sm:%s420] %v431
                %v433 = vld [vmem:[%s427 + $0x20] sm:%s420]
                %434 = vst [vmem:[%s428 + $0x10] sm:%s420] %v433
                %v435 = vld [vmem:[%s427 + $0x30] sm:%s420]
                %436 = vst [vmem:[%s428 + $0x18] sm:%s420] %v435
                %v437 = vld [vmem:[%s427 + $0x40] sm:%s420]
                %438 = vst [vmem:[%s428 + $0x20] sm:%s420] %v437
                %v439 = vld [vmem:[%s427 + $0x50] sm:%s420]
                %440 = vst [vmem:[%s428 + $0x28] sm:%s420] %v439
                %v441 = vld [vmem:[%s427 + $0x60] sm:%s420]
                %442 = vst [vmem:[%s428 + $0x30] sm:%s420] %v441
                %v443 = vld [vmem:[%s427 + $0x70] sm:%s420]
                %444 = vst [vmem:[%s428 + $0x38] sm:%s420] %v443
                %v445 = vld [vmem:[%s427 + $0x80] sm:%s420]
                %446 = vst [vmem:[%s428 + $0x40] sm:%s420] %v445
                %v447 = vld [vmem:[%s427 + $0x90] sm:%s420]
                %448 = vst [vmem:[%s428 + $0x48] sm:%s420] %v447
                %v449 = vld [vmem:[%s427 + $0xa0] sm:%s420]
                %450 = vst [vmem:[%s428 + $0x50] sm:%s420] %v449
                %v451 = vld [vmem:[%s427 + $0xb0] sm:%s420]
                %452 = vst [vmem:[%s428 + $0x58] sm:%s420] %v451
                %v453 = vld [vmem:[%s427 + $0xc0] sm:%s420]
                %454 = vst [vmem:[%s428 + $0x60] sm:%s420] %v453
                %v455 = vld [vmem:[%s427 + $0xd0] sm:%s420]
                %456 = vst [vmem:[%s428 + $0x68] sm:%s420] %v455
                %v457 = vld [vmem:[%s427 + $0xe0] sm:%s420]
                %458 = vst [vmem:[%s428 + $0x70] sm:%s420] %v457
                %v459 = vld [vmem:[%s427 + $0xf0] sm:%s420]
                %460 = vst [vmem:[%s428 + $0x78] sm:%s420] %v459
              $region95: #{tpu_custom_call.1} parent=89 // loop_footer
                %s426 = sadd.s32 1, %s422
              $region96: #{tpu_custom_call.1} parent=89 // loop_footer_branch
                %421 = sbr.rel target = $region92
              $region97: #{tpu_custom_call.1} parent=89 // loop_exit
                _
            $region90: #{tpu_custom_call.1} parent=81 // pred_fallthru
              _
          $region82: #{tpu_custom_call.1} parent=77 // pred_fallthru
            _
          %505 = vnop
        $region78: #{tpu_custom_call.1} parent=35 // pred_fallthru
          _
        // Predicated region
        $region113: #{tpu_custom_call.1} parent=35 // pred_check
          %p506 = pneg %p122
        $region114: #{tpu_custom_call.1} parent=35 // pred_check_branch
          %508 = sbr.rel (%p506) target = $region116
        $region115: #{tpu_custom_call.1} parent=35 // pred_region
          %s509 = sand.u32 %s112, 1
          %s510 = scalar_lea.sflag [#allocation5], %s509
          %s511 = sand.u32 %s112, 1
          %s512 = smul.addr %s511, 128
          %s513 = scalar_lea.vmem [#allocation4], %s512
          %s514 = sadd.s32 %s28, 1
          %p515 = scmp.lt.s32.totalorder %s514, 1
          %s516 = scalar_select %p515, %s514, 1
          %518 = vsyncadd %s510, 0
          %s519 = smul.addr %s27, 32
          %s520 = sadd.s32 %s516, %s519
          %s521 = smul.addr %s520, 8
          %s522 = scalar_lea.hbm %s2, %s521
          %s523 = sshll.u32 %s522, 4
          %s524 = int_to_ptr.hbm [resolvable:$true] %s523
          %s525 = sshll.u32 %s513, 4
          %s526 = int_to_ptr.vmem [resolvable:$true] %s525
          %531 = dma.hbm_to_vmem [thread:$0]  %s524, 2048, %s526, %s510, 256, 128, 8
        $region116: #{tpu_custom_call.1} parent=35 // pred_fallthru
          _
      $region36: #{tpu_custom_call.1} parent=5 // pred_fallthru
        _
      %p532 = scmp.le.s32.totalorder 1, %s20
      %p533 = scmp.lt.s32.totalorder %s20, 5
      %p534 = pnand %p532, %p533
      %p535 = pneg %p534
      // Predicated region
      $region117: #{tpu_custom_call.1} parent=5 // pred_check
        _
      $region118: #{tpu_custom_call.1} parent=5 // pred_check_branch
        %537 = sbr.rel (%p534) target = $region120
      $region119: #{tpu_custom_call.1} parent=5 // pred_region
        %s538 = ssub.s32 %s20, 1
        %s539 = sand.u32 %s47, 1
        %s540 = sand.u32 %s47, 1
        %s541 = smul.addr %s540, 128
        %s542 = scalar_lea.vmem [#allocation2], %s541
        // Predicated region
        $region121: #{tpu_custom_call.1} parent=119 // pred_check
          %p543 = pneg %p60
        $region122: #{tpu_custom_call.1} parent=119 // pred_check_branch
          %545 = sbr.rel (%p543) target = $region124
        $region123: #{tpu_custom_call.1} parent=119 // pred_region
          _
        $region124: #{tpu_custom_call.1} parent=119 // pred_fallthru
          _
        %s546 = sand.u32 %s81, 1
        %s547 = sand.u32 %s81, 1
        %s548 = smul.addr %s547, 128
        %s549 = scalar_lea.vmem [#allocation3], %s548
        // Predicated region
        $region125: #{tpu_custom_call.1} parent=119 // pred_check
          %p550 = pneg %p94
        $region126: #{tpu_custom_call.1} parent=119 // pred_check_branch
          %552 = sbr.rel (%p550) target = $region128
        $region127: #{tpu_custom_call.1} parent=119 // pred_region
          _
        $region128: #{tpu_custom_call.1} parent=119 // pred_fallthru
          _
        %s553 = sand.u32 %s115, 1
        %s554 = scalar_lea.sflag [#allocation5], %s553
        %s555 = sand.u32 %s115, 1
        %s556 = smul.addr %s555, 128
        %s557 = scalar_lea.vmem [#allocation4], %s556
        // Predicated region
        $region129: #{tpu_custom_call.1} parent=119 // pred_check
          %p558 = pneg %p128
        $region130: #{tpu_custom_call.1} parent=119 // pred_check_branch
          %560 = sbr.rel (%p558) target = $region132
        $region131: #{tpu_custom_call.1} parent=119 // pred_region
          %562 = dma.done %s554, 2048
        $region132: #{tpu_custom_call.1} parent=119 // pred_fallthru
          _
        %s563 = sand.u32 %s47, 1
        %s564 = sand.u32 %s47, 1
        %s565 = smul.addr %s564, 128
        %s566 = scalar_lea.vmem [#allocation2], %s565
        %p567 = pneg %p60
        %p568 = pneg %p57
        %s569 = sand.u32 %s81, 1
        %s570 = sand.u32 %s81, 1
        %s571 = smul.addr %s570, 128
        %s572 = scalar_lea.vmem [#allocation3], %s571
        %p573 = pneg %p94
        %p574 = pneg %p91
        %s575 = sand.u32 %s115, 1
        %s576 = scalar_lea.sflag [#allocation5], %s575
        %s577 = sand.u32 %s115, 1
        %s578 = smul.addr %s577, 128
        %s579 = scalar_lea.vmem [#allocation4], %s578
        %p580 = pneg %p128
        %p581 = pneg %p125
        %p582 = pneg %p149
        %p583 = pneg %p146
        %p584 = pneg %p170
        %p585 = pneg %p167
        %p586 = pneg %p191
        %p587 = pneg %p188
        %p588 = pneg %p212
        %p589 = pneg %p209
        %p590 = pneg %p233
        %p591 = pneg %p230
        %p592 = pneg %p261
        %p593 = pneg %p258
        %s594 = sand.u32 %s248, 1
        %s595 = scalar_lea.sflag [#allocation6], %s594
        %s596 = sand.u32 %s248, 1
        %s597 = smul.addr %s596, 384
        %s598 = scalar_lea.vmem [#allocation7], %s597
        %s599 = ssub.s32 %s30, 1
        %p600 = scmp.gt.s32.totalorder %s599, 0
        %s601 = scalar_select %p600, %s599, 0
        %s602 = sadd.s32 %s30, 1
        %p603 = scmp.lt.s32.totalorder %s602, 1
        %s604 = scalar_select %p603, %s602, 1
        %v605 = vld [vmem:[%s4] sm:$0xff]
        %v606 = vld [vmem:[%s4 + $0x8] sm:$0xff]
        %v607 = vld [vmem:[%s4 + $0x10] sm:$0xff]
        %v608 = vld [vmem:[%s4 + $0x18] sm:$0xff]
        %v609 = vld [vmem:[%s5] sm:$0xff]
        %v610 = vld [vmem:[%s5 + $0x8] sm:$0xff]
        %v611 = vld [vmem:[%s5 + $0x10] sm:$0xff]
        %v612 = vld [vmem:[%s5 + $0x18] sm:$0xff]
        %v613 = vld [vmem:[%s542] sm:$0xff]
        %v614 = vld [vmem:[%s542 + $0x8] sm:$0xff]
        %v615 = vld [vmem:[%s542 + $0x10] sm:$0xff]
        %v616 = vld [vmem:[%s542 + $0x18] sm:$0xff]
        %v617 = vld [vmem:[%s542 + $0x20] sm:$0xff]
        %v618 = vld [vmem:[%s542 + $0x28] sm:$0xff]
        %v619 = vld [vmem:[%s542 + $0x30] sm:$0xff]
        %v620 = vld [vmem:[%s542 + $0x38] sm:$0xff]
        %v621 = vld [vmem:[%s542 + $0x40] sm:$0xff]
        %v622 = vld [vmem:[%s542 + $0x48] sm:$0xff]
        %v623 = vld [vmem:[%s542 + $0x50] sm:$0xff]
        %v624 = vld [vmem:[%s542 + $0x58] sm:$0xff]
        %v625 = vld [vmem:[%s542 + $0x60] sm:$0xff]
        %v626 = vld [vmem:[%s542 + $0x68] sm:$0xff]
        %v627 = vld [vmem:[%s542 + $0x70] sm:$0xff]
        %v628 = vld [vmem:[%s542 + $0x78] sm:$0xff]
        %630 = vset.pattern.permute.xlu0 0
        %631 = vperm.xlu0 %630, %v609
        %v632 = vpop.permute.xlu0 %631
        %635 = vset.pattern.permute.xlu0 0
        %636 = vperm.xlu0 %635, %v610
        %v637 = vpop.permute.xlu0 %636
        %640 = vset.pattern.permute.xlu0 0
        %641 = vperm.xlu0 %640, %v611
        %v642 = vpop.permute.xlu0 %641
        %645 = vset.pattern.permute.xlu0 0
        %646 = vperm.xlu0 %645, %v612
        %v647 = vpop.permute.xlu0 %646
        %649 = vmatpush.msra.mxu0 %v628
        %650 = vmatpush.msra.mxu0 %v627
        %651 = vmatpush.msra.mxu0 %v626
        %652 = vmatpush.msra.mxu0 %v625
        %653 = vmatpush.msra.mxu0 %v624
        %654 = vmatpush.msra.mxu0 %v623
        %655 = vmatpush.msra.mxu0 %v622
        %656 = vmatpush.msra.mxu0 %v621
        %657 = vmatpush.msra.mxu0 %v620
        %658 = vmatpush.msra.mxu0 %v619
        %659 = vmatpush.msra.mxu0 %v618
        %660 = vmatpush.msra.mxu0 %v617
        %661 = vmatpush.msra.mxu0 %v616
        %662 = vmatpush.msra.mxu0 %v615
        %663 = vmatpush.msra.mxu0 %v614
        %664 = vmatpush.msra.mxu0 %v613
        %665 = vmatmul.f32.gmra.mxu0 %v605
        %v666 = vpop.f32.mrf.mxu0
        %v667 = vadd.f32 %v632, %v666
        %668 = vmatmul.f32.gmra.mxu0 %v606
        %v669 = vpop.f32.mrf.mxu0
        %v670 = vadd.f32 %v637, %v669
        %671 = vmatmul.f32.gmra.mxu0 %v607
        %v672 = vpop.f32.mrf.mxu0
        %v673 = vadd.f32 %v642, %v672
        %674 = vmatmul.f32.gmra.mxu0 %v608
        %v675 = vpop.f32.mrf.mxu0
        %v676 = vadd.f32 %v647, %v675
        %677 = vdwg.mxu0
        %v678 = vmax.f32 %v667, 0.0
        %v679 = vmax.f32 %v670, 0.0
        %v680 = vmax.f32 %v673, 0.0
        %v681 = vmax.f32 %v676, 0.0
        %v682 = vld [vmem:[%s549] sm:$0xff]
        %v683 = vld [vmem:[%s549 + $0x8] sm:$0xff]
        %v684 = vld [vmem:[%s549 + $0x10] sm:$0xff]
        %v685 = vld [vmem:[%s549 + $0x18] sm:$0xff]
        %v686 = vld [vmem:[%s549 + $0x20] sm:$0xff]
        %v687 = vld [vmem:[%s549 + $0x28] sm:$0xff]
        %v688 = vld [vmem:[%s549 + $0x30] sm:$0xff]
        %v689 = vld [vmem:[%s549 + $0x38] sm:$0xff]
        %v690 = vld [vmem:[%s549 + $0x40] sm:$0xff]
        %v691 = vld [vmem:[%s549 + $0x48] sm:$0xff]
        %v692 = vld [vmem:[%s549 + $0x50] sm:$0xff]
        %v693 = vld [vmem:[%s549 + $0x58] sm:$0xff]
        %v694 = vld [vmem:[%s549 + $0x60] sm:$0xff]
        %v695 = vld [vmem:[%s549 + $0x68] sm:$0xff]
        %v696 = vld [vmem:[%s549 + $0x70] sm:$0xff]
        %v697 = vld [vmem:[%s549 + $0x78] sm:$0xff]
        %v698 = vld [vmem:[%s557] sm:$0xff]
        %v699 = vld [vmem:[%s557 + $0x8] sm:$0xff]
        %v700 = vld [vmem:[%s557 + $0x10] sm:$0xff]
        %v701 = vld [vmem:[%s557 + $0x18] sm:$0xff]
        %v702 = vld [vmem:[%s557 + $0x20] sm:$0xff]
        %v703 = vld [vmem:[%s557 + $0x28] sm:$0xff]
        %v704 = vld [vmem:[%s557 + $0x30] sm:$0xff]
        %v705 = vld [vmem:[%s557 + $0x38] sm:$0xff]
        %v706 = vld [vmem:[%s557 + $0x40] sm:$0xff]
        %v707 = vld [vmem:[%s557 + $0x48] sm:$0xff]
        %v708 = vld [vmem:[%s557 + $0x50] sm:$0xff]
        %v709 = vld [vmem:[%s557 + $0x58] sm:$0xff]
        %v710 = vld [vmem:[%s557 + $0x60] sm:$0xff]
        %v711 = vld [vmem:[%s557 + $0x68] sm:$0xff]
        %v712 = vld [vmem:[%s557 + $0x70] sm:$0xff]
        %v713 = vld [vmem:[%s557 + $0x78] sm:$0xff]
        %730 = vrot.lane.b32.xlu0 %v682, 16
        %v731 = vpop.permute.xlu0 %730
        %732 = vrot.lane.b32.xlu0 %v683, 16
        %v733 = vpop.permute.xlu0 %732
        %734 = vrot.lane.b32.xlu0 %v684, 16
        %v735 = vpop.permute.xlu0 %734
        %736 = vrot.lane.b32.xlu0 %v685, 16
        %v737 = vpop.permute.xlu0 %736
        %738 = vrot.lane.b32.xlu0 %v686, 16
        %v739 = vpop.permute.xlu0 %738
        %740 = vrot.lane.b32.xlu0 %v687, 16
        %v741 = vpop.permute.xlu0 %740
        %742 = vrot.lane.b32.xlu0 %v688, 16
        %v743 = vpop.permute.xlu0 %742
        %744 = vrot.lane.b32.xlu0 %v689, 16
        %v745 = vpop.permute.xlu0 %744
        %746 = vrot.lane.b32.xlu0 %v690, 16
        %v747 = vpop.permute.xlu0 %746
        %748 = vrot.lane.b32.xlu0 %v691, 16
        %v749 = vpop.permute.xlu0 %748
        %750 = vrot.lane.b32.xlu0 %v692, 16
        %v751 = vpop.permute.xlu0 %750
        %752 = vrot.lane.b32.xlu0 %v693, 16
        %v753 = vpop.permute.xlu0 %752
        %754 = vrot.lane.b32.xlu0 %v694, 16
        %v755 = vpop.permute.xlu0 %754
        %756 = vrot.lane.b32.xlu0 %v695, 16
        %v757 = vpop.permute.xlu0 %756
        %758 = vrot.lane.b32.xlu0 %v696, 16
        %v759 = vpop.permute.xlu0 %758
        %760 = vrot.lane.b32.xlu0 %v697, 16
        %v761 = vpop.permute.xlu0 %760
        %778 = vmatpush.msra.mxu0 %v761
        %779 = vmatpush.msra.mxu0 %v759
        %780 = vmatpush.msra.mxu0 %v757
        %781 = vmatpush.msra.mxu0 %v755
        %782 = vmatpush.msra.mxu0 %v753
        %783 = vmatpush.msra.mxu0 %v751
        %784 = vmatpush.msra.mxu0 %v749
        %785 = vmatpush.msra.mxu0 %v747
        %786 = vmatpush.msra.mxu0 %v745
        %787 = vmatpush.msra.mxu0 %v743
        %788 = vmatpush.msra.mxu0 %v741
        %789 = vmatpush.msra.mxu0 %v739
        %790 = vmatpush.msra.mxu0 %v737
        %791 = vmatpush.msra.mxu0 %v735
        %792 = vmatpush.msra.mxu0 %v733
        %793 = vmatpush.msra.mxu0 %v731
        %794 = vmatmul.f32.gmra.mxu0 %v605
        %v795 = vpop.f32.mrf.mxu0
        %v796 = vadd.f32 %v632, %v795
        %797 = vmatmul.f32.gmra.mxu0 %v606
        %v798 = vpop.f32.mrf.mxu0
        %v799 = vadd.f32 %v637, %v798
        %800 = vmatmul.f32.gmra.mxu0 %v607
        %v801 = vpop.f32.mrf.mxu0
        %v802 = vadd.f32 %v642, %v801
        %803 = vmatmul.f32.gmra.mxu0 %v608
        %v804 = vpop.f32.mrf.mxu0
        %v805 = vadd.f32 %v647, %v804
        %806 = vdwg.mxu0
        %v807 = vmax.f32 %v796, 0.0
        %v808 = vmax.f32 %v799, 0.0
        %v809 = vmax.f32 %v802, 0.0
        %v810 = vmax.f32 %v805, 0.0
        %p811 = scmp.gt.s32.totalorder %s30, 0
        %s812 = scalar_select %p811, 1, 0
        %s813 = scvt.s32.f32 %s812
        %v814 = vstv %s813
        %v815 = vmul.f32 %v807, %v814
        %v816 = vmul.f32 %v808, %v814
        %v817 = vmul.f32 %v809, %v814
        %v818 = vmul.f32 %v810, %v814
        %819 = vmatpush.msra.mxu0 %v713
        %820 = vmatpush.msra.mxu0 %v712
        %821 = vmatpush.msra.mxu0 %v711
        %822 = vmatpush.msra.mxu0 %v710
        %823 = vmatpush.msra.mxu0 %v709
        %824 = vmatpush.msra.mxu0 %v708
        %825 = vmatpush.msra.mxu0 %v707
        %826 = vmatpush.msra.mxu0 %v706
        %827 = vmatpush.msra.mxu0 %v705
        %828 = vmatpush.msra.mxu0 %v704
        %829 = vmatpush.msra.mxu0 %v703
        %830 = vmatpush.msra.mxu0 %v702
        %831 = vmatpush.msra.mxu0 %v701
        %832 = vmatpush.msra.mxu0 %v700
        %833 = vmatpush.msra.mxu0 %v699
        %834 = vmatpush.msra.mxu0 %v698
        %835 = vmatmul.f32.gmra.mxu0 %v605
        %v836 = vpop.f32.mrf.mxu0
        %v837 = vadd.f32 %v632, %v836
        %838 = vmatmul.f32.gmra.mxu0 %v606
        %v839 = vpop.f32.mrf.mxu0
        %v840 = vadd.f32 %v637, %v839
        %841 = vmatmul.f32.gmra.mxu0 %v607
        %v842 = vpop.f32.mrf.mxu0
        %v843 = vadd.f32 %v642, %v842
        %844 = vmatmul.f32.gmra.mxu0 %v608
        %v845 = vpop.f32.mrf.mxu0
        %v846 = vadd.f32 %v647, %v845
        %847 = vdwg.mxu0
        %v848 = vmax.f32 %v837, 0.0
        %v849 = vmax.f32 %v840, 0.0
        %v850 = vmax.f32 %v843, 0.0
        %v851 = vmax.f32 %v846, 0.0
        %p852 = scmp.lt.s32.totalorder %s30, 1
        %s853 = scalar_select %p852, 1, 0
        %s854 = scvt.s32.f32 %s853
        %v855 = vstv %s854
        %v856 = vmul.f32 %v848, %v855
        %v857 = vmul.f32 %v849, %v855
        %v858 = vmul.f32 %v850, %v855
        %v859 = vmul.f32 %v851, %v855
        %864 = vrot.lane.b32.xlu0 %v678, 16
        %v865 = vpop.permute.xlu0 %864
        %866 = vrot.lane.b32.xlu0 %v679, 16
        %v867 = vpop.permute.xlu0 %866
        %868 = vrot.lane.b32.xlu0 %v680, 16
        %v869 = vpop.permute.xlu0 %868
        %870 = vrot.lane.b32.xlu0 %v681, 16
        %v871 = vpop.permute.xlu0 %870
        %vm876 = vcmask 130048
        %v877 = vsel %vm876, %v815, %v865
        %v878 = vsel %vm876, %v816, %v867
        %v879 = vsel %vm876, %v817, %v869
        %v880 = vsel %vm876, %v818, %v871
        %881 = vrot.lane.b32.xlu0 %v678, 112
        %v882 = vpop.permute.xlu0 %881
        %883 = vrot.lane.b32.xlu0 %v679, 112
        %v884 = vpop.permute.xlu0 %883
        %885 = vrot.lane.b32.xlu0 %v680, 112
        %v886 = vpop.permute.xlu0 %885
        %887 = vrot.lane.b32.xlu0 %v681, 112
        %v888 = vpop.permute.xlu0 %887
        %897 = vrot.lane.b32.xlu0 %v856, 112
        %v898 = vpop.permute.xlu0 %897
        %899 = vrot.lane.b32.xlu0 %v857, 112
        %v900 = vpop.permute.xlu0 %899
        %901 = vrot.lane.b32.xlu0 %v858, 112
        %v902 = vpop.permute.xlu0 %901
        %903 = vrot.lane.b32.xlu0 %v859, 112
        %v904 = vpop.permute.xlu0 %903
        %vm909 = vcmask 916480
        %v910 = vsel %vm909, %v882, %v898
        %v911 = vsel %vm909, %v884, %v900
        %v912 = vsel %vm909, %v886, %v902
        %v913 = vsel %vm909, %v888, %v904
        %v914 = vld [vmem:[%s3] sm:$0x1]
        %v915 = vld [vmem:[%s3 + $0x1] sm:$0x1]
        %916 = vrot.lane.b32.xlu0 %v678, 1
        %v917 = vpop.permute.xlu0 %916
        %918 = vrot.lane.b32.xlu0 %v679, 1
        %v919 = vpop.permute.xlu0 %918
        %920 = vrot.lane.b32.xlu0 %v680, 1
        %v921 = vpop.permute.xlu0 %920
        %922 = vrot.lane.b32.xlu0 %v681, 1
        %v923 = vpop.permute.xlu0 %922
        %vm928 = vcmask 7168
        %v929 = vsel %vm928, 0.0, %v917
        %v930 = vsel %vm928, 0.0, %v919
        %v931 = vsel %vm928, 0.0, %v921
        %v932 = vsel %vm928, 0.0, %v923
        %v933 = vperm.slane %v914, 0
        %v934 = vmul.f32 %v929, %v933
        %v935 = vmul.f32 %v930, %v933
        %v936 = vmul.f32 %v931, %v933
        %v937 = vmul.f32 %v932, %v933
        %938 = vrot.lane.b32.xlu0 %v678, 127
        %v939 = vpop.permute.xlu0 %938
        %940 = vrot.lane.b32.xlu0 %v679, 127
        %v941 = vpop.permute.xlu0 %940
        %942 = vrot.lane.b32.xlu0 %v680, 127
        %v943 = vpop.permute.xlu0 %942
        %944 = vrot.lane.b32.xlu0 %v681, 127
        %v945 = vpop.permute.xlu0 %944
        %vm950 = vcmask 1039360
        %v951 = vsel %vm950, %v939, 0.0
        %v952 = vsel %vm950, %v941, 0.0
        %v953 = vsel %vm950, %v943, 0.0
        %v954 = vsel %vm950, %v945, 0.0
        %v955 = vperm.slane %v915, 0
        %v956 = vmul.f32 %v951, %v955
        %v957 = vmul.f32 %v952, %v955
        %v958 = vmul.f32 %v953, %v955
        %v959 = vmul.f32 %v954, %v955
        %v960 = vld [vmem:[%s6] sm:$0xff]
        %v961 = vld [vmem:[%s6 + $0x8] sm:$0xff]
        %v962 = vld [vmem:[%s6 + $0x10] sm:$0xff]
        %v963 = vld [vmem:[%s6 + $0x18] sm:$0xff]
        %v964 = vld [vmem:[%s6 + $0x20] sm:$0xff]
        %v965 = vld [vmem:[%s6 + $0x28] sm:$0xff]
        %v966 = vld [vmem:[%s6 + $0x30] sm:$0xff]
        %v967 = vld [vmem:[%s6 + $0x38] sm:$0xff]
        %v968 = vld [vmem:[%s6 + $0x40] sm:$0xff]
        %v969 = vld [vmem:[%s6 + $0x48] sm:$0xff]
        %v970 = vld [vmem:[%s6 + $0x50] sm:$0xff]
        %v971 = vld [vmem:[%s6 + $0x58] sm:$0xff]
        %v972 = vld [vmem:[%s6 + $0x60] sm:$0xff]
        %v973 = vld [vmem:[%s6 + $0x68] sm:$0xff]
        %v974 = vld [vmem:[%s6 + $0x70] sm:$0xff]
        %v975 = vld [vmem:[%s6 + $0x78] sm:$0xff]
        %v976 = vld [vmem:[%s6 + $0x80] sm:$0xff]
        %v977 = vld [vmem:[%s6 + $0x88] sm:$0xff]
        %v978 = vld [vmem:[%s6 + $0x90] sm:$0xff]
        %v979 = vld [vmem:[%s6 + $0x98] sm:$0xff]
        %v980 = vld [vmem:[%s6 + $0xa0] sm:$0xff]
        %v981 = vld [vmem:[%s6 + $0xa8] sm:$0xff]
        %v982 = vld [vmem:[%s6 + $0xb0] sm:$0xff]
        %v983 = vld [vmem:[%s6 + $0xb8] sm:$0xff]
        %v984 = vld [vmem:[%s6 + $0xc0] sm:$0xff]
        %v985 = vld [vmem:[%s6 + $0xc8] sm:$0xff]
        %v986 = vld [vmem:[%s6 + $0xd0] sm:$0xff]
        %v987 = vld [vmem:[%s6 + $0xd8] sm:$0xff]
        %v988 = vld [vmem:[%s6 + $0xe0] sm:$0xff]
        %v989 = vld [vmem:[%s6 + $0xe8] sm:$0xff]
        %v990 = vld [vmem:[%s6 + $0xf0] sm:$0xff]
        %v991 = vld [vmem:[%s6 + $0xf8] sm:$0xff]
        %v992 = vld [vmem:[%s6 + $0x100] sm:$0xff]
        %v993 = vld [vmem:[%s6 + $0x108] sm:$0xff]
        %v994 = vld [vmem:[%s6 + $0x110] sm:$0xff]
        %v995 = vld [vmem:[%s6 + $0x118] sm:$0xff]
        %v996 = vld [vmem:[%s6 + $0x120] sm:$0xff]
        %v997 = vld [vmem:[%s6 + $0x128] sm:$0xff]
        %v998 = vld [vmem:[%s6 + $0x130] sm:$0xff]
        %v999 = vld [vmem:[%s6 + $0x138] sm:$0xff]
        %v1000 = vld [vmem:[%s6 + $0x140] sm:$0xff]
        %v1001 = vld [vmem:[%s6 + $0x148] sm:$0xff]
        %v1002 = vld [vmem:[%s6 + $0x150] sm:$0xff]
        %v1003 = vld [vmem:[%s6 + $0x158] sm:$0xff]
        %v1004 = vld [vmem:[%s6 + $0x160] sm:$0xff]
        %v1005 = vld [vmem:[%s6 + $0x168] sm:$0xff]
        %v1006 = vld [vmem:[%s6 + $0x170] sm:$0xff]
        %v1007 = vld [vmem:[%s6 + $0x178] sm:$0xff]
        %v1008 = vld [vmem:[%s6 + $0x180] sm:$0xff]
        %v1009 = vld [vmem:[%s6 + $0x188] sm:$0xff]
        %v1010 = vld [vmem:[%s6 + $0x190] sm:$0xff]
        %v1011 = vld [vmem:[%s6 + $0x198] sm:$0xff]
        %v1012 = vld [vmem:[%s6 + $0x1a0] sm:$0xff]
        %v1013 = vld [vmem:[%s6 + $0x1a8] sm:$0xff]
        %v1014 = vld [vmem:[%s6 + $0x1b0] sm:$0xff]
        %v1015 = vld [vmem:[%s6 + $0x1b8] sm:$0xff]
        %v1016 = vld [vmem:[%s6 + $0x1c0] sm:$0xff]
        %v1017 = vld [vmem:[%s6 + $0x1c8] sm:$0xff]
        %v1018 = vld [vmem:[%s6 + $0x1d0] sm:$0xff]
        %v1019 = vld [vmem:[%s6 + $0x1d8] sm:$0xff]
        %v1020 = vld [vmem:[%s6 + $0x1e0] sm:$0xff]
        %v1021 = vld [vmem:[%s6 + $0x1e8] sm:$0xff]
        %v1022 = vld [vmem:[%s6 + $0x1f0] sm:$0xff]
        %v1023 = vld [vmem:[%s6 + $0x1f8] sm:$0xff]
        %v1024 = vld [vmem:[%s7] sm:$0xff]
        %v1025 = vld [vmem:[%s7 + $0x8] sm:$0xff]
        %v1026 = vld [vmem:[%s7 + $0x10] sm:$0xff]
        %v1027 = vld [vmem:[%s7 + $0x18] sm:$0xff]
        %v1028 = vld [vmem:[%s7 + $0x20] sm:$0xff]
        %v1029 = vld [vmem:[%s7 + $0x28] sm:$0xff]
        %v1030 = vld [vmem:[%s7 + $0x30] sm:$0xff]
        %v1031 = vld [vmem:[%s7 + $0x38] sm:$0xff]
        %v1032 = vld [vmem:[%s7 + $0x40] sm:$0xff]
        %v1033 = vld [vmem:[%s7 + $0x48] sm:$0xff]
        %v1034 = vld [vmem:[%s7 + $0x50] sm:$0xff]
        %v1035 = vld [vmem:[%s7 + $0x58] sm:$0xff]
        %v1036 = vld [vmem:[%s7 + $0x60] sm:$0xff]
        %v1037 = vld [vmem:[%s7 + $0x68] sm:$0xff]
        %v1038 = vld [vmem:[%s7 + $0x70] sm:$0xff]
        %v1039 = vld [vmem:[%s7 + $0x78] sm:$0xff]
        %v1040 = vld [vmem:[%s7 + $0x80] sm:$0xff]
        %v1041 = vld [vmem:[%s7 + $0x88] sm:$0xff]
        %v1042 = vld [vmem:[%s7 + $0x90] sm:$0xff]
        %v1043 = vld [vmem:[%s7 + $0x98] sm:$0xff]
        %v1044 = vld [vmem:[%s7 + $0xa0] sm:$0xff]
        %v1045 = vld [vmem:[%s7 + $0xa8] sm:$0xff]
        %v1046 = vld [vmem:[%s7 + $0xb0] sm:$0xff]
        %v1047 = vld [vmem:[%s7 + $0xb8] sm:$0xff]
        %v1048 = vld [vmem:[%s7 + $0xc0] sm:$0xff]
        %v1049 = vld [vmem:[%s7 + $0xc8] sm:$0xff]
        %v1050 = vld [vmem:[%s7 + $0xd0] sm:$0xff]
        %v1051 = vld [vmem:[%s7 + $0xd8] sm:$0xff]
        %v1052 = vld [vmem:[%s7 + $0xe0] sm:$0xff]
        %v1053 = vld [vmem:[%s7 + $0xe8] sm:$0xff]
        %v1054 = vld [vmem:[%s7 + $0xf0] sm:$0xff]
        %v1055 = vld [vmem:[%s7 + $0xf8] sm:$0xff]
        %1057 = vset.pattern.permute.xlu0 0
        %1058 = vperm.xlu0 %1057, %v1024
        %v1059 = vpop.permute.xlu0 %1058
        %1062 = vset.pattern.permute.xlu0 0
        %1063 = vperm.xlu0 %1062, %v1025
        %v1064 = vpop.permute.xlu0 %1063
        %1067 = vset.pattern.permute.xlu0 0
        %1068 = vperm.xlu0 %1067, %v1026
        %v1069 = vpop.permute.xlu0 %1068
        %1072 = vset.pattern.permute.xlu0 0
        %1073 = vperm.xlu0 %1072, %v1027
        %v1074 = vpop.permute.xlu0 %1073
        %1077 = vset.pattern.permute.xlu0 0
        %1078 = vperm.xlu0 %1077, %v1028
        %v1079 = vpop.permute.xlu0 %1078
        %1082 = vset.pattern.permute.xlu0 0
        %1083 = vperm.xlu0 %1082, %v1029
        %v1084 = vpop.permute.xlu0 %1083
        %1087 = vset.pattern.permute.xlu0 0
        %1088 = vperm.xlu0 %1087, %v1030
        %v1089 = vpop.permute.xlu0 %1088
        %1092 = vset.pattern.permute.xlu0 0
        %1093 = vperm.xlu0 %1092, %v1031
        %v1094 = vpop.permute.xlu0 %1093
        %1097 = vset.pattern.permute.xlu0 0
        %1098 = vperm.xlu0 %1097, %v1032
        %v1099 = vpop.permute.xlu0 %1098
        %1102 = vset.pattern.permute.xlu0 0
        %1103 = vperm.xlu0 %1102, %v1033
        %v1104 = vpop.permute.xlu0 %1103
        %1107 = vset.pattern.permute.xlu0 0
        %1108 = vperm.xlu0 %1107, %v1034
        %v1109 = vpop.permute.xlu0 %1108
        %1112 = vset.pattern.permute.xlu0 0
        %1113 = vperm.xlu0 %1112, %v1035
        %v1114 = vpop.permute.xlu0 %1113
        %1117 = vset.pattern.permute.xlu0 0
        %1118 = vperm.xlu0 %1117, %v1036
        %v1119 = vpop.permute.xlu0 %1118
        %1122 = vset.pattern.permute.xlu0 0
        %1123 = vperm.xlu0 %1122, %v1037
        %v1124 = vpop.permute.xlu0 %1123
        %1127 = vset.pattern.permute.xlu0 0
        %1128 = vperm.xlu0 %1127, %v1038
        %v1129 = vpop.permute.xlu0 %1128
        %1132 = vset.pattern.permute.xlu0 0
        %1133 = vperm.xlu0 %1132, %v1039
        %v1134 = vpop.permute.xlu0 %1133
        %1137 = vset.pattern.permute.xlu0 0
        %1138 = vperm.xlu0 %1137, %v1040
        %v1139 = vpop.permute.xlu0 %1138
        %1142 = vset.pattern.permute.xlu0 0
        %1143 = vperm.xlu0 %1142, %v1041
        %v1144 = vpop.permute.xlu0 %1143
        %1147 = vset.pattern.permute.xlu0 0
        %1148 = vperm.xlu0 %1147, %v1042
        %v1149 = vpop.permute.xlu0 %1148
        %1152 = vset.pattern.permute.xlu0 0
        %1153 = vperm.xlu0 %1152, %v1043
        %v1154 = vpop.permute.xlu0 %1153
        %1157 = vset.pattern.permute.xlu0 0
        %1158 = vperm.xlu0 %1157, %v1044
        %v1159 = vpop.permute.xlu0 %1158
        %1162 = vset.pattern.permute.xlu0 0
        %1163 = vperm.xlu0 %1162, %v1045
        %v1164 = vpop.permute.xlu0 %1163
        %1167 = vset.pattern.permute.xlu0 0
        %1168 = vperm.xlu0 %1167, %v1046
        %v1169 = vpop.permute.xlu0 %1168
        %1172 = vset.pattern.permute.xlu0 0
        %1173 = vperm.xlu0 %1172, %v1047
        %v1174 = vpop.permute.xlu0 %1173
        %1177 = vset.pattern.permute.xlu0 0
        %1178 = vperm.xlu0 %1177, %v1048
        %v1179 = vpop.permute.xlu0 %1178
        %1182 = vset.pattern.permute.xlu0 0
        %1183 = vperm.xlu0 %1182, %v1049
        %v1184 = vpop.permute.xlu0 %1183
        %1187 = vset.pattern.permute.xlu0 0
        %1188 = vperm.xlu0 %1187, %v1050
        %v1189 = vpop.permute.xlu0 %1188
        %1192 = vset.pattern.permute.xlu0 0
        %1193 = vperm.xlu0 %1192, %v1051
        %v1194 = vpop.permute.xlu0 %1193
        %1197 = vset.pattern.permute.xlu0 0
        %1198 = vperm.xlu0 %1197, %v1052
        %v1199 = vpop.permute.xlu0 %1198
        %1202 = vset.pattern.permute.xlu0 0
        %1203 = vperm.xlu0 %1202, %v1053
        %v1204 = vpop.permute.xlu0 %1203
        %1207 = vset.pattern.permute.xlu0 0
        %1208 = vperm.xlu0 %1207, %v1054
        %v1209 = vpop.permute.xlu0 %1208
        %1212 = vset.pattern.permute.xlu0 0
        %1213 = vperm.xlu0 %1212, %v1055
        %v1214 = vpop.permute.xlu0 %1213
        %vm1216 = vcmask 261120
        %v1218 = vsel %vm1216, %v961, 0
        %v1221 = vsel %vm1216, %v963, 0
        %v1224 = vsel %vm1216, %v965, 0
        %v1227 = vsel %vm1216, %v967, 0
        %v1230 = vsel %vm1216, %v969, 0
        %v1233 = vsel %vm1216, %v971, 0
        %v1236 = vsel %vm1216, %v973, 0
        %v1239 = vsel %vm1216, %v975, 0
        %v1242 = vsel %vm1216, %v977, 0
        %v1245 = vsel %vm1216, %v979, 0
        %v1248 = vsel %vm1216, %v981, 0
        %v1251 = vsel %vm1216, %v983, 0
        %v1254 = vsel %vm1216, %v985, 0
        %v1257 = vsel %vm1216, %v987, 0
        %v1260 = vsel %vm1216, %v989, 0
        %v1263 = vsel %vm1216, %v991, 0
        %v1266 = vsel %vm1216, %v993, 0
        %v1269 = vsel %vm1216, %v995, 0
        %v1272 = vsel %vm1216, %v997, 0
        %v1275 = vsel %vm1216, %v999, 0
        %v1278 = vsel %vm1216, %v1001, 0
        %v1281 = vsel %vm1216, %v1003, 0
        %v1284 = vsel %vm1216, %v1005, 0
        %v1287 = vsel %vm1216, %v1007, 0
        %v1290 = vsel %vm1216, %v1009, 0
        %v1293 = vsel %vm1216, %v1011, 0
        %v1296 = vsel %vm1216, %v1013, 0
        %v1299 = vsel %vm1216, %v1015, 0
        %v1302 = vsel %vm1216, %v1017, 0
        %v1305 = vsel %vm1216, %v1019, 0
        %v1308 = vsel %vm1216, %v1021, 0
        %v1311 = vsel %vm1216, %v1023, 0
        %1313 = vmatpush.msra.mxu0 %v937
        %1314 = vmatpush.msra.mxu0 %v936
        %1315 = vmatpush.msra.mxu0 %v935
        %1316 = vmatpush.msra.mxu0 %v934
        %1317 = vmatpush.msra.mxu0 %v913
        %1318 = vmatpush.msra.mxu0 %v912
        %1319 = vmatpush.msra.mxu0 %v911
        %1320 = vmatpush.msra.mxu0 %v910
        %1321 = vmatpush.msra.mxu0 %v880
        %1322 = vmatpush.msra.mxu0 %v879
        %1323 = vmatpush.msra.mxu0 %v878
        %1324 = vmatpush.msra.mxu0 %v877
        %1325 = vmatpush.msra.mxu0 %v681
        %1326 = vmatpush.msra.mxu0 %v680
        %1327 = vmatpush.msra.mxu0 %v679
        %1328 = vmatpush.msra.mxu0 %v678
        %1329 = vmatmul.f32.gmra.mxu0 %v960
        %v1330 = vpop.f32.mrf.mxu0
        %v1331 = vadd.f32 %v1059, %v1330
        %1332 = vmatmul.f32.gmra.mxu0 %v962
        %v1333 = vpop.f32.mrf.mxu0
        %v1334 = vadd.f32 %v1064, %v1333
        %1335 = vmatmul.f32.gmra.mxu0 %v964
        %v1336 = vpop.f32.mrf.mxu0
        %v1337 = vadd.f32 %v1069, %v1336
        %1338 = vmatmul.f32.gmra.mxu0 %v966
        %v1339 = vpop.f32.mrf.mxu0
        %v1340 = vadd.f32 %v1074, %v1339
        %1341 = vmatmul.f32.gmra.mxu0 %v968
        %v1342 = vpop.f32.mrf.mxu0
        %v1343 = vadd.f32 %v1079, %v1342
        %1344 = vmatmul.f32.gmra.mxu0 %v970
        %v1345 = vpop.f32.mrf.mxu0
        %v1346 = vadd.f32 %v1084, %v1345
        %1347 = vmatmul.f32.gmra.mxu0 %v972
        %v1348 = vpop.f32.mrf.mxu0
        %v1349 = vadd.f32 %v1089, %v1348
        %1350 = vmatmul.f32.gmra.mxu0 %v974
        %v1351 = vpop.f32.mrf.mxu0
        %v1352 = vadd.f32 %v1094, %v1351
        %1353 = vmatmul.f32.gmra.mxu0 %v976
        %v1354 = vpop.f32.mrf.mxu0
        %v1355 = vadd.f32 %v1099, %v1354
        %1356 = vmatmul.f32.gmra.mxu0 %v978
        %v1357 = vpop.f32.mrf.mxu0
        %v1358 = vadd.f32 %v1104, %v1357
        %1359 = vmatmul.f32.gmra.mxu0 %v980
        %v1360 = vpop.f32.mrf.mxu0
        %v1361 = vadd.f32 %v1109, %v1360
        %1362 = vmatmul.f32.gmra.mxu0 %v982
        %v1363 = vpop.f32.mrf.mxu0
        %v1364 = vadd.f32 %v1114, %v1363
        %1365 = vmatmul.f32.gmra.mxu0 %v984
        %v1366 = vpop.f32.mrf.mxu0
        %v1367 = vadd.f32 %v1119, %v1366
        %1368 = vmatmul.f32.gmra.mxu0 %v986
        %v1369 = vpop.f32.mrf.mxu0
        %v1370 = vadd.f32 %v1124, %v1369
        %1371 = vmatmul.f32.gmra.mxu0 %v988
        %v1372 = vpop.f32.mrf.mxu0
        %v1373 = vadd.f32 %v1129, %v1372
        %1374 = vmatmul.f32.gmra.mxu0 %v990
        %v1375 = vpop.f32.mrf.mxu0
        %v1376 = vadd.f32 %v1134, %v1375
        %1377 = vmatmul.f32.gmra.mxu0 %v992
        %v1378 = vpop.f32.mrf.mxu0
        %v1379 = vadd.f32 %v1139, %v1378
        %1380 = vmatmul.f32.gmra.mxu0 %v994
        %v1381 = vpop.f32.mrf.mxu0
        %v1382 = vadd.f32 %v1144, %v1381
        %1383 = vmatmul.f32.gmra.mxu0 %v996
        %v1384 = vpop.f32.mrf.mxu0
        %v1385 = vadd.f32 %v1149, %v1384
        %1386 = vmatmul.f32.gmra.mxu0 %v998
        %v1387 = vpop.f32.mrf.mxu0
        %v1388 = vadd.f32 %v1154, %v1387
        %1389 = vmatmul.f32.gmra.mxu0 %v1000
        %v1390 = vpop.f32.mrf.mxu0
        %v1391 = vadd.f32 %v1159, %v1390
        %1392 = vmatmul.f32.gmra.mxu0 %v1002
        %v1393 = vpop.f32.mrf.mxu0
        %v1394 = vadd.f32 %v1164, %v1393
        %1395 = vmatmul.f32.gmra.mxu0 %v1004
        %v1396 = vpop.f32.mrf.mxu0
        %v1397 = vadd.f32 %v1169, %v1396
        %1398 = vmatmul.f32.gmra.mxu0 %v1006
        %v1399 = vpop.f32.mrf.mxu0
        %v1400 = vadd.f32 %v1174, %v1399
        %1401 = vmatmul.f32.gmra.mxu0 %v1008
        %v1402 = vpop.f32.mrf.mxu0
        %v1403 = vadd.f32 %v1179, %v1402
        %1404 = vmatmul.f32.gmra.mxu0 %v1010
        %v1405 = vpop.f32.mrf.mxu0
        %v1406 = vadd.f32 %v1184, %v1405
        %1407 = vmatmul.f32.gmra.mxu0 %v1012
        %v1408 = vpop.f32.mrf.mxu0
        %v1409 = vadd.f32 %v1189, %v1408
        %1410 = vmatmul.f32.gmra.mxu0 %v1014
        %v1411 = vpop.f32.mrf.mxu0
        %v1412 = vadd.f32 %v1194, %v1411
        %1413 = vmatmul.f32.gmra.mxu0 %v1016
        %v1414 = vpop.f32.mrf.mxu0
        %v1415 = vadd.f32 %v1199, %v1414
        %1416 = vmatmul.f32.gmra.mxu0 %v1018
        %v1417 = vpop.f32.mrf.mxu0
        %v1418 = vadd.f32 %v1204, %v1417
        %1419 = vmatmul.f32.gmra.mxu0 %v1020
        %v1420 = vpop.f32.mrf.mxu0
        %v1421 = vadd.f32 %v1209, %v1420
        %1422 = vmatmul.f32.gmra.mxu0 %v1022
        %v1423 = vpop.f32.mrf.mxu0
        %v1424 = vadd.f32 %v1214, %v1423
        %1425 = vdwg.mxu0
        %1426 = vmatpush.msra.mxu0 0.0
        %1427 = vmatpush.msra.mxu0 0.0
        %1428 = vmatpush.msra.mxu0 0.0
        %1429 = vmatpush.msra.mxu0 0.0
        %1430 = vmatpush.msra.mxu0 0.0
        %1431 = vmatpush.msra.mxu0 0.0
        %1432 = vmatpush.msra.mxu0 0.0
        %1433 = vmatpush.msra.mxu0 0.0
        %1434 = vmatpush.msra.mxu0 0.0
        %1435 = vmatpush.msra.mxu0 0.0
        %1436 = vmatpush.msra.mxu0 0.0
        %1437 = vmatpush.msra.mxu0 0.0
        %1438 = vmatpush.msra.mxu0 %v959
        %1439 = vmatpush.msra.mxu0 %v958
        %1440 = vmatpush.msra.mxu0 %v957
        %1441 = vmatpush.msra.mxu0 %v956
        %1442 = vmatmul.f32.gmra.mxu0 %v1218
        %v1443 = vpop.f32.mrf.mxu0
        %v1444 = vadd.f32 %v1331, %v1443
        %1445 = vmatmul.f32.gmra.mxu0 %v1221
        %v1446 = vpop.f32.mrf.mxu0
        %v1447 = vadd.f32 %v1334, %v1446
        %1448 = vmatmul.f32.gmra.mxu0 %v1224
        %v1449 = vpop.f32.mrf.mxu0
        %v1450 = vadd.f32 %v1337, %v1449
        %1451 = vmatmul.f32.gmra.mxu0 %v1227
        %v1452 = vpop.f32.mrf.mxu0
        %v1453 = vadd.f32 %v1340, %v1452
        %1454 = vmatmul.f32.gmra.mxu0 %v1230
        %v1455 = vpop.f32.mrf.mxu0
        %v1456 = vadd.f32 %v1343, %v1455
        %1457 = vmatmul.f32.gmra.mxu0 %v1233
        %v1458 = vpop.f32.mrf.mxu0
        %v1459 = vadd.f32 %v1346, %v1458
        %1460 = vmatmul.f32.gmra.mxu0 %v1236
        %v1461 = vpop.f32.mrf.mxu0
        %v1462 = vadd.f32 %v1349, %v1461
        %1463 = vmatmul.f32.gmra.mxu0 %v1239
        %v1464 = vpop.f32.mrf.mxu0
        %v1465 = vadd.f32 %v1352, %v1464
        %1466 = vmatmul.f32.gmra.mxu0 %v1242
        %v1467 = vpop.f32.mrf.mxu0
        %v1468 = vadd.f32 %v1355, %v1467
        %1469 = vmatmul.f32.gmra.mxu0 %v1245
        %v1470 = vpop.f32.mrf.mxu0
        %v1471 = vadd.f32 %v1358, %v1470
        %1472 = vmatmul.f32.gmra.mxu0 %v1248
        %v1473 = vpop.f32.mrf.mxu0
        %v1474 = vadd.f32 %v1361, %v1473
        %1475 = vmatmul.f32.gmra.mxu0 %v1251
        %v1476 = vpop.f32.mrf.mxu0
        %v1477 = vadd.f32 %v1364, %v1476
        %1478 = vmatmul.f32.gmra.mxu0 %v1254
        %v1479 = vpop.f32.mrf.mxu0
        %v1480 = vadd.f32 %v1367, %v1479
        %1481 = vmatmul.f32.gmra.mxu0 %v1257
        %v1482 = vpop.f32.mrf.mxu0
        %v1483 = vadd.f32 %v1370, %v1482
        %1484 = vmatmul.f32.gmra.mxu0 %v1260
        %v1485 = vpop.f32.mrf.mxu0
        %v1486 = vadd.f32 %v1373, %v1485
        %1487 = vmatmul.f32.gmra.mxu0 %v1263
        %v1488 = vpop.f32.mrf.mxu0
        %v1489 = vadd.f32 %v1376, %v1488
        %1490 = vmatmul.f32.gmra.mxu0 %v1266
        %v1491 = vpop.f32.mrf.mxu0
        %v1492 = vadd.f32 %v1379, %v1491
        %1493 = vmatmul.f32.gmra.mxu0 %v1269
        %v1494 = vpop.f32.mrf.mxu0
        %v1495 = vadd.f32 %v1382, %v1494
        %1496 = vmatmul.f32.gmra.mxu0 %v1272
        %v1497 = vpop.f32.mrf.mxu0
        %v1498 = vadd.f32 %v1385, %v1497
        %1499 = vmatmul.f32.gmra.mxu0 %v1275
        %v1500 = vpop.f32.mrf.mxu0
        %v1501 = vadd.f32 %v1388, %v1500
        %1502 = vmatmul.f32.gmra.mxu0 %v1278
        %v1503 = vpop.f32.mrf.mxu0
        %v1504 = vadd.f32 %v1391, %v1503
        %1505 = vmatmul.f32.gmra.mxu0 %v1281
        %v1506 = vpop.f32.mrf.mxu0
        %v1507 = vadd.f32 %v1394, %v1506
        %1508 = vmatmul.f32.gmra.mxu0 %v1284
        %v1509 = vpop.f32.mrf.mxu0
        %v1510 = vadd.f32 %v1397, %v1509
        %1511 = vmatmul.f32.gmra.mxu0 %v1287
        %v1512 = vpop.f32.mrf.mxu0
        %v1513 = vadd.f32 %v1400, %v1512
        %1514 = vmatmul.f32.gmra.mxu0 %v1290
        %v1515 = vpop.f32.mrf.mxu0
        %v1516 = vadd.f32 %v1403, %v1515
        %1517 = vmatmul.f32.gmra.mxu0 %v1293
        %v1518 = vpop.f32.mrf.mxu0
        %v1519 = vadd.f32 %v1406, %v1518
        %1520 = vmatmul.f32.gmra.mxu0 %v1296
        %v1521 = vpop.f32.mrf.mxu0
        %v1522 = vadd.f32 %v1409, %v1521
        %1523 = vmatmul.f32.gmra.mxu0 %v1299
        %v1524 = vpop.f32.mrf.mxu0
        %v1525 = vadd.f32 %v1412, %v1524
        %1526 = vmatmul.f32.gmra.mxu0 %v1302
        %v1527 = vpop.f32.mrf.mxu0
        %v1528 = vadd.f32 %v1415, %v1527
        %1529 = vmatmul.f32.gmra.mxu0 %v1305
        %v1530 = vpop.f32.mrf.mxu0
        %v1531 = vadd.f32 %v1418, %v1530
        %1532 = vmatmul.f32.gmra.mxu0 %v1308
        %v1533 = vpop.f32.mrf.mxu0
        %v1534 = vadd.f32 %v1421, %v1533
        %1535 = vmatmul.f32.gmra.mxu0 %v1311
        %v1536 = vpop.f32.mrf.mxu0
        %v1537 = vadd.f32 %v1424, %v1536
        %1538 = vdwg.mxu0
        %v1539 = vmax.f32 %v1444, 0.0
        %v1540 = vmax.f32 %v1447, 0.0
        %v1541 = vmax.f32 %v1450, 0.0
        %v1542 = vmax.f32 %v1453, 0.0
        %v1543 = vmax.f32 %v1456, 0.0
        %v1544 = vmax.f32 %v1459, 0.0
        %v1545 = vmax.f32 %v1462, 0.0
        %v1546 = vmax.f32 %v1465, 0.0
        %v1547 = vmax.f32 %v1468, 0.0
        %v1548 = vmax.f32 %v1471, 0.0
        %v1549 = vmax.f32 %v1474, 0.0
        %v1550 = vmax.f32 %v1477, 0.0
        %v1551 = vmax.f32 %v1480, 0.0
        %v1552 = vmax.f32 %v1483, 0.0
        %v1553 = vmax.f32 %v1486, 0.0
        %v1554 = vmax.f32 %v1489, 0.0
        %v1555 = vmax.f32 %v1492, 0.0
        %v1556 = vmax.f32 %v1495, 0.0
        %v1557 = vmax.f32 %v1498, 0.0
        %v1558 = vmax.f32 %v1501, 0.0
        %v1559 = vmax.f32 %v1504, 0.0
        %v1560 = vmax.f32 %v1507, 0.0
        %v1561 = vmax.f32 %v1510, 0.0
        %v1562 = vmax.f32 %v1513, 0.0
        %v1563 = vmax.f32 %v1516, 0.0
        %v1564 = vmax.f32 %v1519, 0.0
        %v1565 = vmax.f32 %v1522, 0.0
        %v1566 = vmax.f32 %v1525, 0.0
        %v1567 = vmax.f32 %v1528, 0.0
        %v1568 = vmax.f32 %v1531, 0.0
        %v1569 = vmax.f32 %v1534, 0.0
        %v1570 = vmax.f32 %v1537, 0.0
        %1571 = vst [vmem:[%s598] sm:$0xff] %v613
        %1572 = vst [vmem:[%s598 + $0x8] sm:$0xff] %v614
        %1573 = vst [vmem:[%s598 + $0x10] sm:$0xff] %v615
        %1574 = vst [vmem:[%s598 + $0x18] sm:$0xff] %v616
        %1575 = vst [vmem:[%s598 + $0x20] sm:$0xff] %v617
        %1576 = vst [vmem:[%s598 + $0x28] sm:$0xff] %v618
        %1577 = vst [vmem:[%s598 + $0x30] sm:$0xff] %v619
        %1578 = vst [vmem:[%s598 + $0x38] sm:$0xff] %v620
        %1579 = vst [vmem:[%s598 + $0x40] sm:$0xff] %v621
        %1580 = vst [vmem:[%s598 + $0x48] sm:$0xff] %v622
        %1581 = vst [vmem:[%s598 + $0x50] sm:$0xff] %v623
        %1582 = vst [vmem:[%s598 + $0x58] sm:$0xff] %v624
        %1583 = vst [vmem:[%s598 + $0x60] sm:$0xff] %v625
        %1584 = vst [vmem:[%s598 + $0x68] sm:$0xff] %v626
        %1585 = vst [vmem:[%s598 + $0x70] sm:$0xff] %v627
        %1586 = vst [vmem:[%s598 + $0x78] sm:$0xff] %v628
        %1587 = vst [vmem:[%s598 + $0x80] sm:$0xff] %v1539
        %1588 = vst [vmem:[%s598 + $0x88] sm:$0xff] %v1540
        %1589 = vst [vmem:[%s598 + $0x90] sm:$0xff] %v1541
        %1590 = vst [vmem:[%s598 + $0x98] sm:$0xff] %v1542
        %1591 = vst [vmem:[%s598 + $0xa0] sm:$0xff] %v1543
        %1592 = vst [vmem:[%s598 + $0xa8] sm:$0xff] %v1544
        %1593 = vst [vmem:[%s598 + $0xb0] sm:$0xff] %v1545
        %1594 = vst [vmem:[%s598 + $0xb8] sm:$0xff] %v1546
        %1595 = vst [vmem:[%s598 + $0xc0] sm:$0xff] %v1547
        %1596 = vst [vmem:[%s598 + $0xc8] sm:$0xff] %v1548
        %1597 = vst [vmem:[%s598 + $0xd0] sm:$0xff] %v1549
        %1598 = vst [vmem:[%s598 + $0xd8] sm:$0xff] %v1550
        %1599 = vst [vmem:[%s598 + $0xe0] sm:$0xff] %v1551
        %1600 = vst [vmem:[%s598 + $0xe8] sm:$0xff] %v1552
        %1601 = vst [vmem:[%s598 + $0xf0] sm:$0xff] %v1553
        %1602 = vst [vmem:[%s598 + $0xf8] sm:$0xff] %v1554
        %1603 = vst [vmem:[%s598 + $0x100] sm:$0xff] %v1555
        %1604 = vst [vmem:[%s598 + $0x108] sm:$0xff] %v1556
        %1605 = vst [vmem:[%s598 + $0x110] sm:$0xff] %v1557
        %1606 = vst [vmem:[%s598 + $0x118] sm:$0xff] %v1558
        %1607 = vst [vmem:[%s598 + $0x120] sm:$0xff] %v1559
        %1608 = vst [vmem:[%s598 + $0x128] sm:$0xff] %v1560
        %1609 = vst [vmem:[%s598 + $0x130] sm:$0xff] %v1561
        %1610 = vst [vmem:[%s598 + $0x138] sm:$0xff] %v1562
        %1611 = vst [vmem:[%s598 + $0x140] sm:$0xff] %v1563
        %1612 = vst [vmem:[%s598 + $0x148] sm:$0xff] %v1564
        %1613 = vst [vmem:[%s598 + $0x150] sm:$0xff] %v1565
        %1614 = vst [vmem:[%s598 + $0x158] sm:$0xff] %v1566
        %1615 = vst [vmem:[%s598 + $0x160] sm:$0xff] %v1567
        %1616 = vst [vmem:[%s598 + $0x168] sm:$0xff] %v1568
        %1617 = vst [vmem:[%s598 + $0x170] sm:$0xff] %v1569
        %1618 = vst [vmem:[%s598 + $0x178] sm:$0xff] %v1570
        %s1619 = sand.u32 %s248, 1
        %s1620 = scalar_lea.sflag [#allocation6], %s1619
        %s1621 = sand.u32 %s248, 1
        %s1622 = smul.addr %s1621, 384
        %s1623 = scalar_lea.vmem [#allocation7], %s1622
        // Predicated region
        $region133: #{tpu_custom_call.1} parent=119 // pred_check
          %p1624 = pneg %p258
        $region134: #{tpu_custom_call.1} parent=119 // pred_check_branch
          %1626 = sbr.rel (%p1624) target = $region136
        $region135: #{tpu_custom_call.1} parent=119 // pred_region
          %1628 = vsyncadd %s1620, 0
          %s1629 = smul.addr %s29, 96
          %s1630 = sadd.s32 %s30, %s1629
          %s1631 = smul.addr %s1630, 8
          %s1632 = scalar_lea.hbm %s8, %s1631
          %s1633 = sshll.u32 %s1623, 4
          %s1634 = int_to_ptr.vmem [resolvable:$true] %s1633
          %s1635 = sshll.u32 %s1632, 4
          %s1636 = int_to_ptr.hbm [resolvable:$true] %s1635
          %1641 = dma.vmem_to_hbm [thread:$0]  %s1634, 6144, %s1636, %s1620, 128, 256, 8
        $region136: #{tpu_custom_call.1} parent=119 // pred_fallthru
          _
      $region120: #{tpu_custom_call.1} parent=5 // pred_fallthru
        _
      %p1642 = scmp.le.s32.totalorder 2, %s20
      // Predicated region
      $region137: #{tpu_custom_call.1} parent=5 // pred_check
        %p1643 = pneg %p1642
      $region138: #{tpu_custom_call.1} parent=5 // pred_check_branch
        %1645 = sbr.rel (%p1643) target = $region140
      $region139: #{tpu_custom_call.1} parent=5 // pred_region
        %s1646 = ssub.s32 %s20, 2
        // Predicated region
        $region141: #{tpu_custom_call.1} parent=139 // pred_check
          %p1647 = pneg %p264
        $region142: #{tpu_custom_call.1} parent=139 // pred_check_branch
          %1649 = sbr.rel (%p1647) target = $region144
        $region143: #{tpu_custom_call.1} parent=139 // pred_region
          %s1650 = sand.u32 %s249, 1
          %s1651 = scalar_lea.sflag [#allocation6], %s1650
          %s1652 = sand.u32 %s249, 1
          %s1653 = smul.addr %s1652, 384
          %s1654 = scalar_lea.vmem [#allocation7], %s1653
          %1656 = dma.done %s1651, 6144
        $region144: #{tpu_custom_call.1} parent=139 // pred_fallthru
          _
      $region140: #{tpu_custom_call.1} parent=5 // pred_fallthru
        _
    $region6: #{tpu_custom_call.1} parent=1 // loop_footer
      %s24 = sadd.s32 1, %s20
    $region7: #{tpu_custom_call.1} parent=1 // loop_footer_branch
      %19 = sbr.rel target = $region3
    $region8: #{tpu_custom_call.1} parent=1 // loop_exit
      _
    %1657 = vsyncpa [#allocation5], 1
    %s1658 = scalar_lea.sflag [#allocation5], 1
    %1659 = vsyncpa %s1658, 1
    %1660 = vsyncpa [#allocation6], 1
    %s1661 = scalar_lea.sflag [#allocation6], 1
    %1662 = vsyncpa %s1661, 1

</llo_original>
